<compile_context>
chip_gen: v7x
topology: tpu7x:2x2x1
jax: 0.10.0
libtpu: 0.0.40
codegen_flags: <defaults>
</compile_context>

<pallas_src>
import math
import jax
import jax.numpy as jnp
import numpy as np
from jax.experimental import pallas as pl
from jax.experimental.pallas import tpu as pltpu  # noqa: F401

# Small, module-consistent shapes.
B, S, IN, U, NHEAD, NHID, OUT = 2, 8, 16, 32, 2, 32, 16
HD = U // NHEAD          # per-head dim
EPS = 1e-5               # nn.LayerNorm default
MASK_N = 5               # banded-causal window parameter (forward's `N`)

# ---- packed-parameter layout -------------------------------------------------
# Weight slab wpack: (U, W_COLS) f32, column-concatenated.
C_QKV = 0                 # (U, 3U)   Wq|Wk|Wv  (Wq pre-scaled by 1/sqrt(HD))
C_ENC = C_QKV + 3 * U     # (IN, U)   encoder linear (rows IN..U-1 are zero padding)
C_O   = C_ENC + U         # (U, U)    attention out-proj
C_1   = C_O + U           # (U, NHID) FF linear1
C_2   = C_1 + NHID        # (NHID, U) FF linear2
C_DEC = C_2 + U           # (U, OUT)  decoder linear
W_COLS = C_DEC + OUT      # = 240

# Bias / LN / positional-encoding slab vpack: (V_ROWS, V_COLS) f32, row-stacked.
V_COLS = 3 * U            # 96 (widest row = fused qkv bias)
R_BENC, R_BQKV, R_BO = 0, 1, 2
R_LN1G, R_LN1B = 3, 4
R_B1, R_B2 = 5, 6
R_LN2G, R_LN2B = 7, 8
R_BDEC = 9
R_PE = 10                 # rows R_PE .. R_PE+S-1 : positional encoding (S, U)
V_ROWS = R_PE + S         # 18


def _layer_norm(x, g, b):
    mu = jnp.mean(x, axis=-1, keepdims=True)
    var = jnp.mean((x - mu) ** 2, axis=-1, keepdims=True)
    return (x - mu) * jax.lax.rsqrt(var + EPS) * g + b


def transformer_kernel(src_ref, w_ref, v_ref, out_ref):
    x = src_ref[...].astype(jnp.float32)        # (B*S, IN)
    wp = w_ref[...]                             # (U, W_COLS)
    vp = v_ref[...]                             # (V_ROWS, V_COLS)

    # --- encoder linear + positional encoding ---
    x = jnp.dot(x, wp[:IN, C_ENC:C_ENC + U],
                preferred_element_type=jnp.float32) + vp[R_BENC:R_BENC + 1, :U]
    pe = vp[R_PE:R_PE + S, :U]                  # (S, U)
    x = x + jnp.concatenate([pe] * B, axis=0)   # (B*S, U)

    # --- fused Q/K/V projection (scale folded into Wq) ---
    qkv = jnp.dot(x, wp[:, C_QKV:C_QKV + 3 * U],
                  preferred_element_type=jnp.float32) + vp[R_BQKV:R_BQKV + 1, :3 * U]
    q = qkv[:, 0:U]
    k = qkv[:, U:2 * U]
    v = qkv[:, 2 * U:3 * U]
    kT = k.T                                    # (U, B*S) — single hoisted transpose

    # --- banded causal mask, built in-kernel ---
    ri = jax.lax.broadcasted_iota(jnp.int32, (S, S), 0)
    ci = jax.lax.broadcasted_iota(jnp.int32, (S, S), 1)
    allowed = (ci <= ri) & (ci >= ri - (MASK_N - 1))
    neg_big = jnp.float32(-1e30)

    # --- multi-head self attention (post-norm TransformerEncoderLayer) ---
    ctx_rows = []
    for b in range(B):                          # static unroll over batch
        r0 = b * S
        heads = []
        for h in range(NHEAD):                  # static unroll over heads
            c0 = h * HD
            qs = q[r0:r0 + S, c0:c0 + HD]       # (S, HD)
            kt = kT[c0:c0 + HD, r0:r0 + S]      # (HD, S)
            vs = v[r0:r0 + S, c0:c0 + HD]       # (S, HD)
            s = jnp.dot(qs, kt, preferred_element_type=jnp.float32)
            s = jnp.where(allowed, s, neg_big)
            s = s - jnp.max(s, axis=-1, keepdims=True)
            p = jnp.exp(s)
            p = p * pl.reciprocal(jnp.sum(p, axis=-1, keepdims=True), approx=True)
            heads.append(jnp.dot(p, vs, preferred_element_type=jnp.float32))
        ctx_rows.append(jnp.concatenate(heads, axis=1))      # (S, U)
    ctx = jnp.concatenate(ctx_rows, axis=0)                   # (B*S, U)
    attn = jnp.dot(ctx, wp[:, C_O:C_O + U],
                   preferred_element_type=jnp.float32) + vp[R_BO:R_BO + 1, :U]

    x = _layer_norm(x + attn, vp[R_LN1G:R_LN1G + 1, :U], vp[R_LN1B:R_LN1B + 1, :U])

    # --- feed forward (ReLU) ---
    ff = jnp.maximum(jnp.dot(x, wp[:, C_1:C_1 + NHID],
                             preferred_element_type=jnp.float32)
                     + vp[R_B1:R_B1 + 1, :NHID], 0.0)
    ff = jnp.dot(ff, wp[:NHID, C_2:C_2 + U],
                 preferred_element_type=jnp.float32) + vp[R_B2:R_B2 + 1, :U]
    x = _layer_norm(x + ff, vp[R_LN2G:R_LN2G + 1, :U], vp[R_LN2B:R_LN2B + 1, :U])

    # --- decoder linear ---
    out_ref[...] = (jnp.dot(x, wp[:, C_DEC:C_DEC + OUT],
                            preferred_element_type=jnp.float32)
                    + vp[R_BDEC:R_BDEC + 1, :OUT]).astype(out_ref.dtype)


def transformer_forward(src, wpack, vpack):
    src2d = src.reshape(B * S, IN)
    out = pl.pallas_call(
        transformer_kernel,
        out_shape=jax.ShapeDtypeStruct((B * S, OUT), jnp.float32),
    )(src2d, wpack, vpack)
    return out.reshape(B, S, OUT)


# --------------------------------------------------------------------------- #
# parameter construction / packing (done once, outside the kernel)
# --------------------------------------------------------------------------- #
def positional_encoding(seq, d_model):
    position = jnp.arange(seq, dtype=jnp.float32)[:, None]
    div_term = jnp.exp(jnp.arange(0, d_model, 2, dtype=jnp.float32)
                       * (-math.log(10000.0) / d_model))
    pe = jnp.zeros((seq, d_model), jnp.float32)
    pe = pe.at[:, 0::2].set(jnp.sin(position * div_term))
    pe = pe.at[:, 1::2].set(jnp.cos(position * div_term))
    return pe


def band_mask(sz, n, m=0):
    # matches _generate_square_subsequent_mask(sz, N, M=0) as used in forward()
    i = jnp.arange(sz)[:, None]
    j = jnp.arange(sz)[None, :]
    allowed = (j <= i) & (j >= i - (n - 1))
    return jnp.where(allowed, 0.0, -jnp.inf).astype(jnp.float32)


def init_params(key):
    def u(k, shape):
        return jax.random.uniform(k, shape, jnp.float32, -0.1, 0.1)
    ks = jax.random.split(key, 8)
    return {
        "w_enc": u(ks[0], (IN, U)), "b_enc": jnp.zeros((1, U), jnp.float32),
        "wq": u(ks[1], (U, U)), "bq": jnp.zeros((1, U), jnp.float32),
        "wk": u(ks[2], (U, U)), "bk": jnp.zeros((1, U), jnp.float32),
        "wv": u(ks[3], (U, U)), "bv": jnp.zeros((1, U), jnp.float32),
        "wo": u(ks[4], (U, U)), "bo": jnp.zeros((1, U), jnp.float32),
        "ln1g": jnp.ones((1, U), jnp.float32), "ln1b": jnp.zeros((1, U), jnp.float32),
        "w1": u(ks[5], (U, NHID)), "b1": jnp.zeros((1, NHID), jnp.float32),
        "w2": u(ks[6], (NHID, U)), "b2": jnp.zeros((1, U), jnp.float32),
        "ln2g": jnp.ones((1, U), jnp.float32), "ln2b": jnp.zeros((1, U), jnp.float32),
        "wdec": u(ks[7], (U, OUT)), "bdec": jnp.zeros((1, OUT), jnp.float32),
    }


def pack_params(p):
    scale = 1.0 / math.sqrt(HD)
    w_qkv = jnp.concatenate([p["wq"] * scale, p["wk"], p["wv"]], axis=1)   # (U, 3U)
    w_enc = jnp.pad(p["w_enc"], ((0, U - IN), (0, 0)))                     # (U, U)
    wpack = jnp.concatenate(
        [w_qkv, w_enc, p["wo"], p["w1"], p["w2"], p["wdec"]], axis=1)      # (U, W_COLS)
    assert wpack.shape == (U, W_COLS)

    def row(v):
        v = v.reshape(1, -1)
        return jnp.pad(v, ((0, 0), (0, V_COLS - v.shape[1])))

    b_qkv = jnp.concatenate([p["bq"], p["bk"], p["bv"]], axis=1)           # (1, 3U)
    pe = positional_encoding(S, U)                                         # (S, U)
    vpack = jnp.concatenate(
        [row(p["b_enc"]), row(b_qkv), row(p["bo"]),
         row(p["ln1g"]), row(p["ln1b"]),
         row(p["b1"]), row(p["b2"]),
         row(p["ln2g"]), row(p["ln2b"]),
         row(p["bdec"]),
         jnp.pad(pe, ((0, 0), (0, V_COLS - U)))], axis=0)                  # (V_ROWS, V_COLS)
    assert vpack.shape == (V_ROWS, V_COLS)
    return wpack, vpack


# --------------------------------------------------------------------------- #
# pure-JAX reference (unpacked params, explicit scale / -inf mask)
# --------------------------------------------------------------------------- #
def reference_forward(src, pe, mask, p):
    x = src @ p["w_enc"] + p["b_enc"]
    x = x + pe[None]
    q = x @ p["wq"] + p["bq"]
    k = x @ p["wk"] + p["bk"]
    v = x @ p["wv"] + p["bv"]
    scale = 1.0 / math.sqrt(HD)
    attn = jnp.zeros_like(x)
    for h in range(NHEAD):
        sl = slice(h * HD, (h + 1) * HD)
        s = jnp.einsum("bqd,bkd->bqk", q[..., sl], k[..., sl]) * scale + mask[None]
        pr = jax.nn.softmax(s, axis=-1)
        ho = jnp.einsum("bqk,bkd->bqd", pr, v[..., sl])
        attn = attn + ho @ p["wo"][sl, :]
    attn = attn + p["bo"]

    def ln(y, g, b):
        mu = y.mean(-1, keepdims=True)
        var = ((y - mu) ** 2).mean(-1, keepdims=True)
        return (y - mu) / jnp.sqrt(var + EPS) * g + b

    x = ln(x + attn, p["ln1g"], p["ln1b"])
    ff = jax.nn.relu(x @ p["w1"] + p["b1"]) @ p["w2"] + p["b2"]
    x = ln(x + ff, p["ln2g"], p["ln2b"])
    return x @ p["wdec"] + p["bdec"]


if __name__ == "__main__":
    key = jax.random.PRNGKey(0)
    k_src, k_par = jax.random.split(key)
    src = jax.random.normal(k_src, (B, S, IN), jnp.float32)
    params = init_params(k_par)
    wpack, vpack = pack_params(params)

    out = transformer_forward(src, wpack, vpack)
    jax.block_until_ready(out)

    pe = positional_encoding(S, U)
    mask = band_mask(S, MASK_N)
    ref = reference_forward(src, pe, mask, params)
    assert out.shape == (B, S, OUT)
    np.testing.assert_allclose(np.asarray(out), np.asarray(ref), rtol=2e-3, atol=2e-3)
    print("KERNEL_OK")
</pallas_src>

<mosaic_0001>
module attributes {stable_mosaic.version = 11 : i64} {
  func.func @transformer_kernel(%arg0: memref<16x16xf32, #tpu.memory_space<vmem>>, %arg1: memref<32x240xf32, #tpu.memory_space<vmem>>, %arg2: memref<18x96xf32, #tpu.memory_space<vmem>>, %arg3: memref<16x16xf32, #tpu.memory_space<vmem>>) attributes {dimension_semantics = [], scalar_prefetch = 0 : i64, scratch_operands = 0 : i64, tpu.core_type = #tpu.core_type<tc>} {
    %c0 = arith.constant 0 : index
    %c0_0 = arith.constant 0 : index
    %0 = vector.load %arg0[%c0, %c0_0] : memref<16x16xf32, #tpu.memory_space<vmem>>, vector<16x16xf32>
    %c0_1 = arith.constant 0 : index
    %c0_2 = arith.constant 0 : index
    %1 = vector.load %arg1[%c0_1, %c0_2] : memref<32x240xf32, #tpu.memory_space<vmem>>, vector<32x240xf32>
    %c0_3 = arith.constant 0 : index
    %c0_4 = arith.constant 0 : index
    %2 = vector.load %arg2[%c0_3, %c0_4] : memref<18x96xf32, #tpu.memory_space<vmem>>, vector<18x96xf32>
    %3 = vector.extract_strided_slice %1 {offsets = [0, 96], sizes = [16, 32], strides = [1, 1]} : vector<32x240xf32> to vector<16x32xf32>
    %cst = arith.constant dense<0.000000e+00> : vector<16x32xf32>
    %4 = tpu.matmul %0, %3, %cst {dimension_numbers = #tpu.dot_dimension_numbers<[1], [0], [0], [1], [0, 0, 1, 1], [], []>} : vector<16x16xf32>, vector<16x32xf32>, vector<16x32xf32> -> vector<16x32xf32>
    %5 = vector.extract_strided_slice %2 {offsets = [0, 0], sizes = [1, 32], strides = [1, 1]} : vector<18x96xf32> to vector<1x32xf32>
    %6 = vector.broadcast %5 : vector<1x32xf32> to vector<16x32xf32>
    %7 = arith.addf %4, %6 : vector<16x32xf32>
    %8 = vector.extract_strided_slice %2 {offsets = [10, 0], sizes = [8, 32], strides = [1, 1]} : vector<18x96xf32> to vector<8x32xf32>
    %9 = tpu.concatenate %8, %8 in 0 : vector<8x32xf32>, vector<8x32xf32> -> vector<16x32xf32>
    %10 = arith.addf %7, %9 : vector<16x32xf32>
    %11 = vector.extract_strided_slice %1 {offsets = [0, 0], sizes = [32, 96], strides = [1, 1]} : vector<32x240xf32> to vector<32x96xf32>
    %cst_5 = arith.constant dense<0.000000e+00> : vector<16x96xf32>
    %12 = tpu.matmul %10, %11, %cst_5 {dimension_numbers = #tpu.dot_dimension_numbers<[1], [0], [0], [1], [0, 0, 1, 1], [], []>} : vector<16x32xf32>, vector<32x96xf32>, vector<16x96xf32> -> vector<16x96xf32>
    %13 = vector.extract_strided_slice %2 {offsets = [1, 0], sizes = [1, 96], strides = [1, 1]} : vector<18x96xf32> to vector<1x96xf32>
    %14 = vector.broadcast %13 : vector<1x96xf32> to vector<16x96xf32>
    %15 = arith.addf %12, %14 : vector<16x96xf32>
    %16 = vector.extract_strided_slice %15 {offsets = [0, 0], sizes = [16, 32], strides = [1, 1]} : vector<16x96xf32> to vector<16x32xf32>
    %17 = vector.extract_strided_slice %15 {offsets = [0, 32], sizes = [16, 32], strides = [1, 1]} : vector<16x96xf32> to vector<16x32xf32>
    %18 = vector.extract_strided_slice %15 {offsets = [0, 64], sizes = [16, 32], strides = [1, 1]} : vector<16x96xf32> to vector<16x32xf32>
    %19 = tpu.transpose %17, [1, 0] : vector<16x32xf32> -> vector<32x16xf32>
    %20 = tpu.iota {dimensions = array<i32: 0>} : vector<8x8xi32>
    %21 = tpu.iota {dimensions = array<i32: 1>} : vector<8x8xi32>
    %22 = arith.cmpi sle, %21, %20 : vector<8x8xi32>
    %c4_i32 = arith.constant 4 : i32
    %23 = vector.broadcast %c4_i32 : i32 to vector<8x8xi32>
    %24 = arith.subi %20, %23 : vector<8x8xi32>
    %25 = arith.cmpi sge, %21, %24 : vector<8x8xi32>
    %26 = arith.andi %22, %25 : vector<8x8xi1>
    %27 = vector.extract_strided_slice %16 {offsets = [0, 0], sizes = [8, 16], strides = [1, 1]} : vector<16x32xf32> to vector<8x16xf32>
    %28 = vector.extract_strided_slice %19 {offsets = [0, 0], sizes = [16, 8], strides = [1, 1]} : vector<32x16xf32> to vector<16x8xf32>
    %29 = vector.extract_strided_slice %18 {offsets = [0, 0], sizes = [8, 16], strides = [1, 1]} : vector<16x32xf32> to vector<8x16xf32>
    %cst_6 = arith.constant dense<0.000000e+00> : vector<8x8xf32>
    %30 = tpu.matmul %27, %28, %cst_6 {dimension_numbers = #tpu.dot_dimension_numbers<[1], [0], [0], [1], [0, 0, 1, 1], [], []>} : vector<8x16xf32>, vector<16x8xf32>, vector<8x8xf32> -> vector<8x8xf32>
    %cst_7 = arith.constant -1.000000e+30 : f32
    %31 = vector.broadcast %cst_7 : f32 to vector<8x8xf32>
    %32 = arith.select %26, %30, %31 : vector<8x8xi1>, vector<8x8xf32>
    %cst_8 = arith.constant dense<0xFF800000> : vector<8xf32>
    %33 = vector.multi_reduction <maximumf>, %32, %cst_8 [1] : vector<8x8xf32> to vector<8xf32>
    %34 = vector.shape_cast %33 : vector<8xf32> to vector<8x1xf32>
    %35 = vector.broadcast %34 : vector<8x1xf32> to vector<8x8xf32>
    %36 = arith.subf %32, %35 : vector<8x8xf32>
    %37 = math.exp %36 : vector<8x8xf32>
    %cst_9 = arith.constant dense<0.000000e+00> : vector<8xf32>
    %38 = vector.multi_reduction <add>, %37, %cst_9 [1] : vector<8x8xf32> to vector<8xf32>
    %39 = vector.shape_cast %38 : vector<8xf32> to vector<8x1xf32>
    %40 = tpu.reciprocal %39 {approx = true} : vector<8x1xf32> -> vector<8x1xf32>
    %41 = vector.broadcast %40 : vector<8x1xf32> to vector<8x8xf32>
    %42 = arith.mulf %37, %41 : vector<8x8xf32>
    %cst_10 = arith.constant dense<0.000000e+00> : vector<8x16xf32>
    %43 = tpu.matmul %42, %29, %cst_10 {dimension_numbers = #tpu.dot_dimension_numbers<[1], [0], [0], [1], [0, 0, 1, 1], [], []>} : vector<8x8xf32>, vector<8x16xf32>, vector<8x16xf32> -> vector<8x16xf32>
    %44 = vector.extract_strided_slice %16 {offsets = [0, 16], sizes = [8, 16], strides = [1, 1]} : vector<16x32xf32> to vector<8x16xf32>
    %45 = vector.extract_strided_slice %19 {offsets = [16, 0], sizes = [16, 8], strides = [1, 1]} : vector<32x16xf32> to vector<16x8xf32>
    %46 = vector.extract_strided_slice %18 {offsets = [0, 16], sizes = [8, 16], strides = [1, 1]} : vector<16x32xf32> to vector<8x16xf32>
    %cst_11 = arith.constant dense<0.000000e+00> : vector<8x8xf32>
    %47 = tpu.matmul %44, %45, %cst_11 {dimension_numbers = #tpu.dot_dimension_numbers<[1], [0], [0], [1], [0, 0, 1, 1], [], []>} : vector<8x16xf32>, vector<16x8xf32>, vector<8x8xf32> -> vector<8x8xf32>
    %cst_12 = arith.constant -1.000000e+30 : f32
    %48 = vector.broadcast %cst_12 : f32 to vector<8x8xf32>
    %49 = arith.select %26, %47, %48 : vector<8x8xi1>, vector<8x8xf32>
    %cst_13 = arith.constant dense<0xFF800000> : vector<8xf32>
    %50 = vector.multi_reduction <maximumf>, %49, %cst_13 [1] : vector<8x8xf32> to vector<8xf32>
    %51 = vector.shape_cast %50 : vector<8xf32> to vector<8x1xf32>
    %52 = vector.broadcast %51 : vector<8x1xf32> to vector<8x8xf32>
    %53 = arith.subf %49, %52 : vector<8x8xf32>
    %54 = math.exp %53 : vector<8x8xf32>
    %cst_14 = arith.constant dense<0.000000e+00> : vector<8xf32>
    %55 = vector.multi_reduction <add>, %54, %cst_14 [1] : vector<8x8xf32> to vector<8xf32>
    %56 = vector.shape_cast %55 : vector<8xf32> to vector<8x1xf32>
    %57 = tpu.reciprocal %56 {approx = true} : vector<8x1xf32> -> vector<8x1xf32>
    %58 = vector.broadcast %57 : vector<8x1xf32> to vector<8x8xf32>
    %59 = arith.mulf %54, %58 : vector<8x8xf32>
    %cst_15 = arith.constant dense<0.000000e+00> : vector<8x16xf32>
    %60 = tpu.matmul %59, %46, %cst_15 {dimension_numbers = #tpu.dot_dimension_numbers<[1], [0], [0], [1], [0, 0, 1, 1], [], []>} : vector<8x8xf32>, vector<8x16xf32>, vector<8x16xf32> -> vector<8x16xf32>
    %61 = tpu.concatenate %43, %60 in 1 : vector<8x16xf32>, vector<8x16xf32> -> vector<8x32xf32>
    %62 = vector.extract_strided_slice %16 {offsets = [8, 0], sizes = [8, 16], strides = [1, 1]} : vector<16x32xf32> to vector<8x16xf32>
    %63 = vector.extract_strided_slice %19 {offsets = [0, 8], sizes = [16, 8], strides = [1, 1]} : vector<32x16xf32> to vector<16x8xf32>
    %64 = vector.extract_strided_slice %18 {offsets = [8, 0], sizes = [8, 16], strides = [1, 1]} : vector<16x32xf32> to vector<8x16xf32>
    %cst_16 = arith.constant dense<0.000000e+00> : vector<8x8xf32>
    %65 = tpu.matmul %62, %63, %cst_16 {dimension_numbers = #tpu.dot_dimension_numbers<[1], [0], [0], [1], [0, 0, 1, 1], [], []>} : vector<8x16xf32>, vector<16x8xf32>, vector<8x8xf32> -> vector<8x8xf32>
    %cst_17 = arith.constant -1.000000e+30 : f32
    %66 = vector.broadcast %cst_17 : f32 to vector<8x8xf32>
    %67 = arith.select %26, %65, %66 : vector<8x8xi1>, vector<8x8xf32>
    %cst_18 = arith.constant dense<0xFF800000> : vector<8xf32>
    %68 = vector.multi_reduction <maximumf>, %67, %cst_18 [1] : vector<8x8xf32> to vector<8xf32>
    %69 = vector.shape_cast %68 : vector<8xf32> to vector<8x1xf32>
    %70 = vector.broadcast %69 : vector<8x1xf32> to vector<8x8xf32>
    %71 = arith.subf %67, %70 : vector<8x8xf32>
    %72 = math.exp %71 : vector<8x8xf32>
    %cst_19 = arith.constant dense<0.000000e+00> : vector<8xf32>
    %73 = vector.multi_reduction <add>, %72, %cst_19 [1] : vector<8x8xf32> to vector<8xf32>
    %74 = vector.shape_cast %73 : vector<8xf32> to vector<8x1xf32>
    %75 = tpu.reciprocal %74 {approx = true} : vector<8x1xf32> -> vector<8x1xf32>
    %76 = vector.broadcast %75 : vector<8x1xf32> to vector<8x8xf32>
    %77 = arith.mulf %72, %76 : vector<8x8xf32>
    %cst_20 = arith.constant dense<0.000000e+00> : vector<8x16xf32>
    %78 = tpu.matmul %77, %64, %cst_20 {dimension_numbers = #tpu.dot_dimension_numbers<[1], [0], [0], [1], [0, 0, 1, 1], [], []>} : vector<8x8xf32>, vector<8x16xf32>, vector<8x16xf32> -> vector<8x16xf32>
    %79 = vector.extract_strided_slice %16 {offsets = [8, 16], sizes = [8, 16], strides = [1, 1]} : vector<16x32xf32> to vector<8x16xf32>
    %80 = vector.extract_strided_slice %19 {offsets = [16, 8], sizes = [16, 8], strides = [1, 1]} : vector<32x16xf32> to vector<16x8xf32>
    %81 = vector.extract_strided_slice %18 {offsets = [8, 16], sizes = [8, 16], strides = [1, 1]} : vector<16x32xf32> to vector<8x16xf32>
    %cst_21 = arith.constant dense<0.000000e+00> : vector<8x8xf32>
    %82 = tpu.matmul %79, %80, %cst_21 {dimension_numbers = #tpu.dot_dimension_numbers<[1], [0], [0], [1], [0, 0, 1, 1], [], []>} : vector<8x16xf32>, vector<16x8xf32>, vector<8x8xf32> -> vector<8x8xf32>
    %cst_22 = arith.constant -1.000000e+30 : f32
    %83 = vector.broadcast %cst_22 : f32 to vector<8x8xf32>
    %84 = arith.select %26, %82, %83 : vector<8x8xi1>, vector<8x8xf32>
    %cst_23 = arith.constant dense<0xFF800000> : vector<8xf32>
    %85 = vector.multi_reduction <maximumf>, %84, %cst_23 [1] : vector<8x8xf32> to vector<8xf32>
    %86 = vector.shape_cast %85 : vector<8xf32> to vector<8x1xf32>
    %87 = vector.broadcast %86 : vector<8x1xf32> to vector<8x8xf32>
    %88 = arith.subf %84, %87 : vector<8x8xf32>
    %89 = math.exp %88 : vector<8x8xf32>
    %cst_24 = arith.constant dense<0.000000e+00> : vector<8xf32>
    %90 = vector.multi_reduction <add>, %89, %cst_24 [1] : vector<8x8xf32> to vector<8xf32>
    %91 = vector.shape_cast %90 : vector<8xf32> to vector<8x1xf32>
    %92 = tpu.reciprocal %91 {approx = true} : vector<8x1xf32> -> vector<8x1xf32>
    %93 = vector.broadcast %92 : vector<8x1xf32> to vector<8x8xf32>
    %94 = arith.mulf %89, %93 : vector<8x8xf32>
    %cst_25 = arith.constant dense<0.000000e+00> : vector<8x16xf32>
    %95 = tpu.matmul %94, %81, %cst_25 {dimension_numbers = #tpu.dot_dimension_numbers<[1], [0], [0], [1], [0, 0, 1, 1], [], []>} : vector<8x8xf32>, vector<8x16xf32>, vector<8x16xf32> -> vector<8x16xf32>
    %96 = tpu.concatenate %78, %95 in 1 : vector<8x16xf32>, vector<8x16xf32> -> vector<8x32xf32>
    %97 = tpu.concatenate %61, %96 in 0 : vector<8x32xf32>, vector<8x32xf32> -> vector<16x32xf32>
    %98 = vector.extract_strided_slice %1 {offsets = [0, 128], sizes = [32, 32], strides = [1, 1]} : vector<32x240xf32> to vector<32x32xf32>
    %cst_26 = arith.constant dense<0.000000e+00> : vector<16x32xf32>
    %99 = tpu.matmul %97, %98, %cst_26 {dimension_numbers = #tpu.dot_dimension_numbers<[1], [0], [0], [1], [0, 0, 1, 1], [], []>} : vector<16x32xf32>, vector<32x32xf32>, vector<16x32xf32> -> vector<16x32xf32>
    %100 = vector.extract_strided_slice %2 {offsets = [2, 0], sizes = [1, 32], strides = [1, 1]} : vector<18x96xf32> to vector<1x32xf32>
    %101 = vector.broadcast %100 : vector<1x32xf32> to vector<16x32xf32>
    %102 = arith.addf %99, %101 : vector<16x32xf32>
    %103 = arith.addf %10, %102 : vector<16x32xf32>
    %104 = vector.extract_strided_slice %2 {offsets = [3, 0], sizes = [1, 32], strides = [1, 1]} : vector<18x96xf32> to vector<1x32xf32>
    %105 = vector.extract_strided_slice %2 {offsets = [4, 0], sizes = [1, 32], strides = [1, 1]} : vector<18x96xf32> to vector<1x32xf32>
    %cst_27 = arith.constant dense<0.000000e+00> : vector<16xf32>
    %106 = vector.multi_reduction <add>, %103, %cst_27 [1] : vector<16x32xf32> to vector<16xf32>
    %107 = vector.shape_cast %106 : vector<16xf32> to vector<16x1xf32>
    %cst_28 = arith.constant 3.200000e+01 : f32
    %108 = vector.broadcast %cst_28 : f32 to vector<16x1xf32>
    %109 = arith.divf %107, %108 : vector<16x1xf32>
    %110 = vector.broadcast %109 : vector<16x1xf32> to vector<16x32xf32>
    %111 = arith.subf %103, %110 : vector<16x32xf32>
    %112 = arith.mulf %111, %111 : vector<16x32xf32>
    %cst_29 = arith.constant dense<0.000000e+00> : vector<16xf32>
    %113 = vector.multi_reduction <add>, %112, %cst_29 [1] : vector<16x32xf32> to vector<16xf32>
    %114 = vector.shape_cast %113 : vector<16xf32> to vector<16x1xf32>
    %cst_30 = arith.constant 3.200000e+01 : f32
    %115 = vector.broadcast %cst_30 : f32 to vector<16x1xf32>
    %116 = arith.divf %114, %115 : vector<16x1xf32>
    %117 = vector.broadcast %109 : vector<16x1xf32> to vector<16x32xf32>
    %118 = arith.subf %103, %117 : vector<16x32xf32>
    %cst_31 = arith.constant 9.99999974E-6 : f32
    %119 = vector.broadcast %cst_31 : f32 to vector<16x1xf32>
    %120 = arith.addf %116, %119 : vector<16x1xf32>
    %121 = math.rsqrt %120 : vector<16x1xf32>
    %122 = vector.broadcast %121 : vector<16x1xf32> to vector<16x32xf32>
    %123 = arith.mulf %118, %122 : vector<16x32xf32>
    %124 = vector.broadcast %104 : vector<1x32xf32> to vector<16x32xf32>
    %125 = arith.mulf %123, %124 : vector<16x32xf32>
    %126 = vector.broadcast %105 : vector<1x32xf32> to vector<16x32xf32>
    %127 = arith.addf %125, %126 : vector<16x32xf32>
    %128 = vector.extract_strided_slice %1 {offsets = [0, 160], sizes = [32, 32], strides = [1, 1]} : vector<32x240xf32> to vector<32x32xf32>
    %cst_32 = arith.constant dense<0.000000e+00> : vector<16x32xf32>
    %129 = tpu.matmul %127, %128, %cst_32 {dimension_numbers = #tpu.dot_dimension_numbers<[1], [0], [0], [1], [0, 0, 1, 1], [], []>} : vector<16x32xf32>, vector<32x32xf32>, vector<16x32xf32> -> vector<16x32xf32>
    %130 = vector.extract_strided_slice %2 {offsets = [5, 0], sizes = [1, 32], strides = [1, 1]} : vector<18x96xf32> to vector<1x32xf32>
    %131 = vector.broadcast %130 : vector<1x32xf32> to vector<16x32xf32>
    %132 = arith.addf %129, %131 : vector<16x32xf32>
    %cst_33 = arith.constant 0.000000e+00 : f32
    %133 = vector.broadcast %cst_33 : f32 to vector<16x32xf32>
    %134 = arith.maximumf %132, %133 : vector<16x32xf32>
    %135 = vector.extract_strided_slice %1 {offsets = [0, 192], sizes = [32, 32], strides = [1, 1]} : vector<32x240xf32> to vector<32x32xf32>
    %cst_34 = arith.constant dense<0.000000e+00> : vector<16x32xf32>
    %136 = tpu.matmul %134, %135, %cst_34 {dimension_numbers = #tpu.dot_dimension_numbers<[1], [0], [0], [1], [0, 0, 1, 1], [], []>} : vector<16x32xf32>, vector<32x32xf32>, vector<16x32xf32> -> vector<16x32xf32>
    %137 = vector.extract_strided_slice %2 {offsets = [6, 0], sizes = [1, 32], strides = [1, 1]} : vector<18x96xf32> to vector<1x32xf32>
    %138 = vector.broadcast %137 : vector<1x32xf32> to vector<16x32xf32>
    %139 = arith.addf %136, %138 : vector<16x32xf32>
    %140 = arith.addf %127, %139 : vector<16x32xf32>
    %141 = vector.extract_strided_slice %2 {offsets = [7, 0], sizes = [1, 32], strides = [1, 1]} : vector<18x96xf32> to vector<1x32xf32>
    %142 = vector.extract_strided_slice %2 {offsets = [8, 0], sizes = [1, 32], strides = [1, 1]} : vector<18x96xf32> to vector<1x32xf32>
    %cst_35 = arith.constant dense<0.000000e+00> : vector<16xf32>
    %143 = vector.multi_reduction <add>, %140, %cst_35 [1] : vector<16x32xf32> to vector<16xf32>
    %144 = vector.shape_cast %143 : vector<16xf32> to vector<16x1xf32>
    %cst_36 = arith.constant 3.200000e+01 : f32
    %145 = vector.broadcast %cst_36 : f32 to vector<16x1xf32>
    %146 = arith.divf %144, %145 : vector<16x1xf32>
    %147 = vector.broadcast %146 : vector<16x1xf32> to vector<16x32xf32>
    %148 = arith.subf %140, %147 : vector<16x32xf32>
    %149 = arith.mulf %148, %148 : vector<16x32xf32>
    %cst_37 = arith.constant dense<0.000000e+00> : vector<16xf32>
    %150 = vector.multi_reduction <add>, %149, %cst_37 [1] : vector<16x32xf32> to vector<16xf32>
    %151 = vector.shape_cast %150 : vector<16xf32> to vector<16x1xf32>
    %cst_38 = arith.constant 3.200000e+01 : f32
    %152 = vector.broadcast %cst_38 : f32 to vector<16x1xf32>
    %153 = arith.divf %151, %152 : vector<16x1xf32>
    %154 = vector.broadcast %146 : vector<16x1xf32> to vector<16x32xf32>
    %155 = arith.subf %140, %154 : vector<16x32xf32>
    %cst_39 = arith.constant 9.99999974E-6 : f32
    %156 = vector.broadcast %cst_39 : f32 to vector<16x1xf32>
    %157 = arith.addf %153, %156 : vector<16x1xf32>
    %158 = math.rsqrt %157 : vector<16x1xf32>
    %159 = vector.broadcast %158 : vector<16x1xf32> to vector<16x32xf32>
    %160 = arith.mulf %155, %159 : vector<16x32xf32>
    %161 = vector.broadcast %141 : vector<1x32xf32> to vector<16x32xf32>
    %162 = arith.mulf %160, %161 : vector<16x32xf32>
    %163 = vector.broadcast %142 : vector<1x32xf32> to vector<16x32xf32>
    %164 = arith.addf %162, %163 : vector<16x32xf32>
    %165 = vector.extract_strided_slice %1 {offsets = [0, 224], sizes = [32, 16], strides = [1, 1]} : vector<32x240xf32> to vector<32x16xf32>
    %cst_40 = arith.constant dense<0.000000e+00> : vector<16x16xf32>
    %166 = tpu.matmul %164, %165, %cst_40 {dimension_numbers = #tpu.dot_dimension_numbers<[1], [0], [0], [1], [0, 0, 1, 1], [], []>} : vector<16x32xf32>, vector<32x16xf32>, vector<16x16xf32> -> vector<16x16xf32>
    %167 = vector.extract_strided_slice %2 {offsets = [9, 0], sizes = [1, 16], strides = [1, 1]} : vector<18x96xf32> to vector<1x16xf32>
    %168 = vector.broadcast %167 : vector<1x16xf32> to vector<16x16xf32>
    %169 = arith.addf %166, %168 : vector<16x16xf32>
    %c0_41 = arith.constant 0 : index
    %c0_42 = arith.constant 0 : index
    %170 = vector.load %arg3[%c0_41, %c0_42] : memref<16x16xf32, #tpu.memory_space<vmem>>, vector<16x16xf32>
    tpu.vector_store %arg3[%c0_41, %c0_42], %169 {strides = array<i32>} : memref<16x16xf32, #tpu.memory_space<vmem>>, vector<16x16xf32>,
    return
  }
}

</mosaic_0001>

<llo_original>
// kernel: tpu_custom_call.1
$region0: #{tpu_custom_call.1}
  #allocation0 [shape = 'u32[]', space=smem, size = 0x4, offset = 0x4, fixed_abs, tag = 'smem constant byte address 0x4 - core index']
  #allocation1 [shape = 'u32[144,128]{1,0:T(1,128)}', space=vmem, size = 0x12000, scoped, tag = 'internal scratch']
  %s0 = inlined_call_operand.hbm [shape: f32[16,16], index: 0, kind: input, shape index: {}]
  %s1 = inlined_call_operand.hbm [shape: f32[32,240], index: 1, kind: input, shape index: {}]
  %s2 = inlined_call_operand.hbm [shape: f32[18,96], index: 2, kind: input, shape index: {}]
  %s3 = inlined_call_operand.hbm [shape: f32[16,16], index: 3, kind: output, shape index: {}]
  %s4 = sld [smem:[#allocation0]]
  $region34: #{tpu_custom_call.1} parent=0
    _
  %s6 = ssub.s32 1, %s4
  %s7 = scalar_select 0, %s6, %s4
  $region1: #{tpu_custom_call.1} parent=0
    #allocation2 [shape = 'u8[8192]{0}', space=vmem, size = 0x2000, scoped, tag = 'input window, operand 0, single buffered']
    #allocation3 [shape = 's32[1]{0}', space=sflag, size = 0x4, scoped, tag = 'scoped memory for tpu_custom_call.1']
    #allocation4 [shape = 's32[1]{0}', space=sflag, size = 0x4, scoped, tag = 'scoped memory for tpu_custom_call.1']
    #allocation5 [shape = 'u8[32768]{0}', space=vmem, size = 0x8000, scoped, tag = 'input window, operand 1, single buffered']
    #allocation6 [shape = 's32[1]{0}', space=sflag, size = 0x4, scoped, tag = 'scoped memory for tpu_custom_call.1']
    #allocation7 [shape = 'u8[12288]{0}', space=vmem, size = 0x3000, scoped, tag = 'input window, operand 2, single buffered']
    #allocation8 [shape = 'u8[8192]{0}', space=vmem, size = 0x2000, scoped, tag = 'output window, operand 0, single buffered']
    %8 = vsyncpa [#allocation3], 0
    %9 = vsyncpa [#allocation6], 0
    %10 = vsyncpa [#allocation4], 0
    // Predicated region
    $region2: #{tpu_custom_call.1} parent=1 // pred_check
      _
    $region3: #{tpu_custom_call.1} parent=1 // pred_check_branch
      %12 = sbr.rel (0) target = $region5
    $region4: #{tpu_custom_call.1} parent=1 // pred_region
      %s14 = ssub.s32 256, 256
      %15 = vsyncadd [#allocation3], %s14
      %s16 = sshll.u32 [#allocation2], 4
      %s17 = int_to_ptr.vmem [resolvable:$true] %s16
      %22 = dma.hbm_to_vmem [thread:$0]  %s0, 256, %s17, [#allocation3], 128, 128, 8
    $region5: #{tpu_custom_call.1} parent=1 // pred_fallthru
      _
    // Predicated region
    $region6: #{tpu_custom_call.1} parent=1 // pred_check
      _
    $region7: #{tpu_custom_call.1} parent=1 // pred_check_branch
      %24 = sbr.rel (0) target = $region9
    $region8: #{tpu_custom_call.1} parent=1 // pred_region
      %s26 = ssub.s32 1024, 1024
      %27 = vsyncadd [#allocation6], %s26
      %s28 = sshll.u32 [#allocation5], 4
      %s29 = int_to_ptr.vmem [resolvable:$true] %s28
      %34 = dma.hbm_to_vmem [thread:$0]  %s1, 1024, %s29, [#allocation6], 256, 256, 16
    $region9: #{tpu_custom_call.1} parent=1 // pred_fallthru
      _
    // Predicated region
    $region10: #{tpu_custom_call.1} parent=1 // pred_check
      _
    $region11: #{tpu_custom_call.1} parent=1 // pred_check_branch
      %36 = sbr.rel (0) target = $region13
    $region12: #{tpu_custom_call.1} parent=1 // pred_region
      %s38 = ssub.s32 384, 384
      %39 = vsyncadd [#allocation6], %s38
      %s40 = sshll.u32 [#allocation7], 4
      %s41 = int_to_ptr.vmem [resolvable:$true] %s40
      %46 = dma.hbm_to_vmem [thread:$0]  %s2, 384, %s41, [#allocation6], 128, 128, 8
    $region13: #{tpu_custom_call.1} parent=1 // pred_fallthru
      _
    // Predicated region
    $region14: #{tpu_custom_call.1} parent=1 // pred_check
      _
    $region15: #{tpu_custom_call.1} parent=1 // pred_check_branch
      %48 = sbr.rel (0) target = $region17
    $region16: #{tpu_custom_call.1} parent=1 // pred_region
      %49 = dma.done [#allocation3], 256
    $region17: #{tpu_custom_call.1} parent=1 // pred_fallthru
      _
    // Predicated region
    $region18: #{tpu_custom_call.1} parent=1 // pred_check
      _
    $region19: #{tpu_custom_call.1} parent=1 // pred_check_branch
      %51 = sbr.rel (0) target = $region21
    $region20: #{tpu_custom_call.1} parent=1 // pred_region
      %52 = dma.done [#allocation6], 1024
    $region21: #{tpu_custom_call.1} parent=1 // pred_fallthru
      _
    // Predicated region
    $region22: #{tpu_custom_call.1} parent=1 // pred_check
      _
    $region23: #{tpu_custom_call.1} parent=1 // pred_check_branch
      %54 = sbr.rel (0) target = $region25
    $region24: #{tpu_custom_call.1} parent=1 // pred_region
      %55 = dma.done [#allocation6], 384
    $region25: #{tpu_custom_call.1} parent=1 // pred_fallthru
      _
    %v56 = vld [vmem:[#allocation2] sm:$0xff]
    %v57 = vld [vmem:[#allocation2 + $0x8] sm:$0xff]
    %v58 = vld [vmem:[#allocation5] sm:$0xff]
    %v59 = vld [vmem:[#allocation5 + $0x8] sm:$0xff]
    %v60 = vld [vmem:[#allocation5 + $0x10] sm:$0xff]
    %v61 = vld [vmem:[#allocation5 + $0x18] sm:$0xff]
    %v62 = vld [vmem:[#allocation5 + $0x20] sm:$0xff]
    %v63 = vld [vmem:[#allocation5 + $0x28] sm:$0xff]
    %v64 = vld [vmem:[#allocation5 + $0x30] sm:$0xff]
    %v65 = vld [vmem:[#allocation5 + $0x38] sm:$0xff]
    %v66 = vld [vmem:[#allocation7] sm:$0xff]
    %v67 = vld [vmem:[#allocation7 + $0x8] sm:$0xff]
    %v68 = vld [vmem:[#allocation7 + $0x10] sm:$0x3]
    %v69 = vlaneseq
    %v70 = vshrl.u32 %v69, 7
    %v71 = vsub.s32 0, %v70
    %v72 = vrot.slane %v66, %v71
    %75 = vrot.lane.b32.xlu0 %v58, 32
    %v76 = vpop.permute.xlu0 %75
    %77 = vrot.lane.b32.xlu0 %v60, 32
    %v78 = vpop.permute.xlu0 %77
    %vm81 = vcmask 130048
    %v83 = vsel %vm81, %v56, 0
    %v86 = vsel %vm81, %v57, 0
    %88 = vmatprep.subr.mxu0 0.0
    %89 = vmatpush1.msra.mxu0 %v76
    %90 = vmatprep.subr.mxu0 0.0
    %91 = vmatpush1.msra.mxu0 %v78
    %92 = vmatprep.subr.mxu0 0.0
    %93 = vmatpush1.msra.mxu0 0.0
    %94 = vmatprep.subr.mxu0 0.0
    %95 = vmatpush1.msra.mxu0 0.0
    %96 = vmatprep.subr.mxu0 0.0
    %97 = vmatpush1.msra.mxu0 0.0
    %98 = vmatprep.subr.mxu0 0.0
    %99 = vmatpush1.msra.mxu0 0.0
    %100 = vmatprep.subr.mxu0 0.0
    %101 = vmatpush1.msra.mxu0 0.0
    %102 = vmatprep.subr.mxu0 0.0
    %103 = vmatpush1.msra.mxu0 0.0
    %104 = vmatprep.subr.mxu0 0.0
    %105 = vmatpush1.msra.mxu0 0.0
    %106 = vmatprep.subr.mxu0 0.0
    %107 = vmatpush1.msra.mxu0 0.0
    %108 = vmatprep.subr.mxu0 0.0
    %109 = vmatpush1.msra.mxu0 0.0
    %110 = vmatprep.subr.mxu0 0.0
    %111 = vmatpush1.msra.mxu0 0.0
    %112 = vmatprep.subr.mxu0 0.0
    %113 = vmatpush1.msra.mxu0 0.0
    %114 = vmatprep.subr.mxu0 0.0
    %115 = vmatpush1.msra.mxu0 0.0
    %116 = vmatprep.subr.mxu0 0.0
    %117 = vmatpush1.msra.mxu0 0.0
    %118 = vmatprep.subr.mxu0 0.0
    %119 = vmatpush1.msra.mxu0 0.0
    %120 = vmatprep.subr.mxu0 0.0
    %121 = vmatpush1.msra.mxu0 0.0
    %122 = vmatprep.subr.mxu0 0.0
    %123 = vmatpush1.msra.mxu0 0.0
    %124 = vmatprep.subr.mxu0 0.0
    %125 = vmatpush1.msra.mxu0 0.0
    %126 = vmatprep.subr.mxu0 0.0
    %127 = vmatpush1.msra.mxu0 0.0
    %128 = vmatprep.subr.mxu0 0.0
    %129 = vmatpush1.msra.mxu0 0.0
    %130 = vmatprep.subr.mxu0 0.0
    %131 = vmatpush1.msra.mxu0 0.0
    %132 = vmatprep.subr.mxu0 0.0
    %133 = vmatpush1.msra.mxu0 0.0
    %134 = vmatprep.subr.mxu0 0.0
    %135 = vmatpush1.msra.mxu0 0.0
    %136 = vmatprep.subr.mxu0 0.0
    %137 = vmatpush1.msra.mxu0 0.0
    %138 = vmatprep.subr.mxu0 0.0
    %139 = vmatpush1.msra.mxu0 0.0
    %140 = vmatprep.subr.mxu0 0.0
    %141 = vmatpush1.msra.mxu0 0.0
    %142 = vmatprep.subr.mxu0 0.0
    %143 = vmatpush1.msra.mxu0 0.0
    %144 = vmatprep.subr.mxu0 0.0
    %145 = vmatpush1.msra.mxu0 0.0
    %146 = vmatprep.subr.mxu0 0.0
    %147 = vmatpush1.msra.mxu0 0.0
    %148 = vmatprep.subr.mxu0 0.0
    %149 = vmatpush1.msra.mxu0 0.0
    %150 = vmatprep.subr.mxu0 0.0
    %151 = vmatpush1.msra.mxu0 0.0
    %152 = vmatprep.mubr.f32.mxu0 0.0
    %153 = vmatmul.mubr.f32.gmra.mrb[0].mxu0 %v83
    %v154 = vpop.f32.mrb[0].mxu0
    %v155 = vadd.f32 %v72, %v154
    %v156 = vpop.f32.mrb[0].mxu0
    %157 = vmatprep.mubr.f32.mxu0 0.0
    %158 = vmatmul.mubr.f32.gmra.mrb[0].mxu0 %v86
    %v159 = vpop.f32.mrb[0].mxu0
    %v160 = vadd.f32 %v72, %v159
    %v161 = vpop.f32.mrb[0].mxu0
    %162 = vdwg.mxu0
    %vm165 = vcmask 1045504
    %v166 = vrot.slane %v67, 2
    %v167 = vrot.slane %v68, 2
    %v168 = vsel %vm165, %v166, %v167
    %v170 = vadd.f32 %v155, %v168
    %v171 = vadd.f32 %v160, %v168
    %v172 = vlaneseq
    %v173 = vshrl.u32 %v172, 7
    %v174 = vsub.s32 1, %v173
    %v175 = vrot.slane %v66, %v174
    %vm176 = vcmask 261120
    %v178 = vsel %vm176, %v170, 0
    %v181 = vsel %vm176, %v171, 0
    %183 = vmatprep.subr.mxu0 0.0
    %184 = vmatpush1.msra.mxu0 %v58
    %185 = vmatprep.subr.mxu0 0.0
    %186 = vmatpush1.msra.mxu0 %v60
    %187 = vmatprep.subr.mxu0 0.0
    %188 = vmatpush1.msra.mxu0 %v62
    %189 = vmatprep.subr.mxu0 0.0
    %190 = vmatpush1.msra.mxu0 %v64
    %191 = vmatprep.subr.mxu0 0.0
    %192 = vmatpush1.msra.mxu0 0.0
    %193 = vmatprep.subr.mxu0 0.0
    %194 = vmatpush1.msra.mxu0 0.0
    %195 = vmatprep.subr.mxu0 0.0
    %196 = vmatpush1.msra.mxu0 0.0
    %197 = vmatprep.subr.mxu0 0.0
    %198 = vmatpush1.msra.mxu0 0.0
    %199 = vmatprep.subr.mxu0 0.0
    %200 = vmatpush1.msra.mxu0 0.0
    %201 = vmatprep.subr.mxu0 0.0
    %202 = vmatpush1.msra.mxu0 0.0
    %203 = vmatprep.subr.mxu0 0.0
    %204 = vmatpush1.msra.mxu0 0.0
    %205 = vmatprep.subr.mxu0 0.0
    %206 = vmatpush1.msra.mxu0 0.0
    %207 = vmatprep.subr.mxu0 0.0
    %208 = vmatpush1.msra.mxu0 0.0
    %209 = vmatprep.subr.mxu0 0.0
    %210 = vmatpush1.msra.mxu0 0.0
    %211 = vmatprep.subr.mxu0 0.0
    %212 = vmatpush1.msra.mxu0 0.0
    %213 = vmatprep.subr.mxu0 0.0
    %214 = vmatpush1.msra.mxu0 0.0
    %215 = vmatprep.subr.mxu0 0.0
    %216 = vmatpush1.msra.mxu0 0.0
    %217 = vmatprep.subr.mxu0 0.0
    %218 = vmatpush1.msra.mxu0 0.0
    %219 = vmatprep.subr.mxu0 0.0
    %220 = vmatpush1.msra.mxu0 0.0
    %221 = vmatprep.subr.mxu0 0.0
    %222 = vmatpush1.msra.mxu0 0.0
    %223 = vmatprep.subr.mxu0 0.0
    %224 = vmatpush1.msra.mxu0 0.0
    %225 = vmatprep.subr.mxu0 0.0
    %226 = vmatpush1.msra.mxu0 0.0
    %227 = vmatprep.subr.mxu0 0.0
    %228 = vmatpush1.msra.mxu0 0.0
    %229 = vmatprep.subr.mxu0 0.0
    %230 = vmatpush1.msra.mxu0 0.0
    %231 = vmatprep.subr.mxu0 0.0
    %232 = vmatpush1.msra.mxu0 0.0
    %233 = vmatprep.subr.mxu0 0.0
    %234 = vmatpush1.msra.mxu0 0.0
    %235 = vmatprep.subr.mxu0 0.0
    %236 = vmatpush1.msra.mxu0 0.0
    %237 = vmatprep.subr.mxu0 0.0
    %238 = vmatpush1.msra.mxu0 0.0
    %239 = vmatprep.subr.mxu0 0.0
    %240 = vmatpush1.msra.mxu0 0.0
    %241 = vmatprep.subr.mxu0 0.0
    %242 = vmatpush1.msra.mxu0 0.0
    %243 = vmatprep.subr.mxu0 0.0
    %244 = vmatpush1.msra.mxu0 0.0
    %245 = vmatprep.subr.mxu0 0.0
    %246 = vmatpush1.msra.mxu0 0.0
    %247 = vmatprep.mubr.f32.mxu0 0.0
    %248 = vmatmul.mubr.f32.gmra.mrb[0].mxu0 %v178
    %v249 = vpop.f32.mrb[0].mxu0
    %v250 = vadd.f32 %v175, %v249
    %v251 = vpop.f32.mrb[0].mxu0
    %252 = vmatprep.mubr.f32.mxu0 0.0
    %253 = vmatmul.mubr.f32.gmra.mrb[0].mxu0 %v181
    %v254 = vpop.f32.mrb[0].mxu0
    %v255 = vadd.f32 %v175, %v254
    %v256 = vpop.f32.mrb[0].mxu0
    %257 = vdwg.mxu0
    %v258 = vlaneseq
    %v259 = vshrl.u32 %v258, 7
    %v260 = vlaneseq
    %v261 = vand.u32 %v260, 127
    %vm262 = vcmp.le.s32.totalorder %v261, %v259
    %v263 = vsub.s32 %v259, 4
    %vm264 = vcmp.ge.s32.totalorder %v261, %v263
    %vm265 = vmand %vm262, %vm264
    %267 = vrot.lane.b32.xlu0 %v250, 96
    %v268 = vpop.permute.xlu0 %267
    %v269 = vsel %vm81, %v250, 0
    %v271 = vsel %vm81, %v268, 0
    %273 = vmatprep.subr.mxu0 0.0
    %274 = vmatpush1.xpose.msra.mxu0 %v271
    %275 = vmatprep.subr.mxu0 0.0
    %276 = vmatpush1.xpose.msra.mxu0 0.0
    %277 = vmatprep.subr.mxu0 0.0
    %278 = vmatpush1.xpose.msra.mxu0 0.0
    %279 = vmatprep.subr.mxu0 0.0
    %280 = vmatpush1.xpose.msra.mxu0 0.0
    %281 = vmatprep.subr.mxu0 0.0
    %282 = vmatpush1.xpose.msra.mxu0 0.0
    %283 = vmatprep.subr.mxu0 0.0
    %284 = vmatpush1.xpose.msra.mxu0 0.0
    %285 = vmatprep.subr.mxu0 0.0
    %286 = vmatpush1.xpose.msra.mxu0 0.0
    %287 = vmatprep.subr.mxu0 0.0
    %288 = vmatpush1.xpose.msra.mxu0 0.0
    %289 = vmatprep.subr.mxu0 0.0
    %290 = vmatpush1.xpose.msra.mxu0 0.0
    %291 = vmatprep.subr.mxu0 0.0
    %292 = vmatpush1.xpose.msra.mxu0 0.0
    %293 = vmatprep.subr.mxu0 0.0
    %294 = vmatpush1.xpose.msra.mxu0 0.0
    %295 = vmatprep.subr.mxu0 0.0
    %296 = vmatpush1.xpose.msra.mxu0 0.0
    %297 = vmatprep.subr.mxu0 0.0
    %298 = vmatpush1.xpose.msra.mxu0 0.0
    %299 = vmatprep.subr.mxu0 0.0
    %300 = vmatpush1.xpose.msra.mxu0 0.0
    %301 = vmatprep.subr.mxu0 0.0
    %302 = vmatpush1.xpose.msra.mxu0 0.0
    %303 = vmatprep.subr.mxu0 0.0
    %304 = vmatpush1.xpose.msra.mxu0 0.0
    %305 = vmatprep.subr.mxu0 0.0
    %306 = vmatpush1.xpose.msra.mxu0 0.0
    %307 = vmatprep.subr.mxu0 0.0
    %308 = vmatpush1.xpose.msra.mxu0 0.0
    %309 = vmatprep.subr.mxu0 0.0
    %310 = vmatpush1.xpose.msra.mxu0 0.0
    %311 = vmatprep.subr.mxu0 0.0
    %312 = vmatpush1.xpose.msra.mxu0 0.0
    %313 = vmatprep.subr.mxu0 0.0
    %314 = vmatpush1.xpose.msra.mxu0 0.0
    %315 = vmatprep.subr.mxu0 0.0
    %316 = vmatpush1.xpose.msra.mxu0 0.0
    %317 = vmatprep.subr.mxu0 0.0
    %318 = vmatpush1.xpose.msra.mxu0 0.0
    %319 = vmatprep.subr.mxu0 0.0
    %320 = vmatpush1.xpose.msra.mxu0 0.0
    %321 = vmatprep.subr.mxu0 0.0
    %322 = vmatpush1.xpose.msra.mxu0 0.0
    %323 = vmatprep.subr.mxu0 0.0
    %324 = vmatpush1.xpose.msra.mxu0 0.0
    %325 = vmatprep.subr.mxu0 0.0
    %326 = vmatpush1.xpose.msra.mxu0 0.0
    %327 = vmatprep.subr.mxu0 0.0
    %328 = vmatpush1.xpose.msra.mxu0 0.0
    %329 = vmatprep.subr.mxu0 0.0
    %330 = vmatpush1.xpose.msra.mxu0 0.0
    %331 = vmatprep.subr.mxu0 0.0
    %332 = vmatpush1.xpose.msra.mxu0 0.0
    %333 = vmatprep.subr.mxu0 0.0
    %334 = vmatpush1.xpose.msra.mxu0 0.0
    %335 = vmatprep.subr.mxu0 0.0
    %336 = vmatpush1.xpose.msra.mxu0 0.0
    %337 = vmatprep.mubr.f32.mxu0 0.0
    %338 = vmatmul.mubr.f32.gmra.mrb[0].mxu0 %v269
    %v339 = vpop.f32.mrb[0].mxu0
    %v340 = vadd.f32 0.0, %v339
    %v341 = vpop.f32.mrb[0].mxu0
    %342 = vdwg.mxu0
    %v343 = vsel %vm265, %v340, -1e+30
    %vm344 = vcmask 64512
    %v345 = vsel %vm344, %v343, -inf
    %346 = vmax.xlane.f32.xlu0 %v345
    %v347 = vpop.xlane.xlu0 %346
    %v348 = vsub.f32 %v343, %v347
    %v349 = vmul.f32 %v348, 1.442695
    %v350 = vpow.pop %v349
    %v351 = vsel %vm344, %v350, 0.0
    %352 = vadd.xlane.f32.xlu0 %v351
    %v353 = vpop.xlane.xlu0 %352
    %v354 = vrcp.pop %v353
    %v355 = vmul.f32 %v350, %v354
    %356 = vrot.lane.b32.xlu0 %v250, 64
    %v357 = vpop.permute.xlu0 %356
    %v360 = vsel %vm344, %v355, 0
    %362 = vmatprep.subr.mxu0 0.0
    %363 = vmatpush1.msra.mxu0 %v357
    %364 = vmatprep.subr.mxu0 0.0
    %365 = vmatpush1.msra.mxu0 0.0
    %366 = vmatprep.subr.mxu0 0.0
    %367 = vmatpush1.msra.mxu0 0.0
    %368 = vmatprep.subr.mxu0 0.0
    %369 = vmatpush1.msra.mxu0 0.0
    %370 = vmatprep.subr.mxu0 0.0
    %371 = vmatpush1.msra.mxu0 0.0
    %372 = vmatprep.subr.mxu0 0.0
    %373 = vmatpush1.msra.mxu0 0.0
    %374 = vmatprep.subr.mxu0 0.0
    %375 = vmatpush1.msra.mxu0 0.0
    %376 = vmatprep.subr.mxu0 0.0
    %377 = vmatpush1.msra.mxu0 0.0
    %378 = vmatprep.subr.mxu0 0.0
    %379 = vmatpush1.msra.mxu0 0.0
    %380 = vmatprep.subr.mxu0 0.0
    %381 = vmatpush1.msra.mxu0 0.0
    %382 = vmatprep.subr.mxu0 0.0
    %383 = vmatpush1.msra.mxu0 0.0
    %384 = vmatprep.subr.mxu0 0.0
    %385 = vmatpush1.msra.mxu0 0.0
    %386 = vmatprep.subr.mxu0 0.0
    %387 = vmatpush1.msra.mxu0 0.0
    %388 = vmatprep.subr.mxu0 0.0
    %389 = vmatpush1.msra.mxu0 0.0
    %390 = vmatprep.subr.mxu0 0.0
    %391 = vmatpush1.msra.mxu0 0.0
    %392 = vmatprep.subr.mxu0 0.0
    %393 = vmatpush1.msra.mxu0 0.0
    %394 = vmatprep.subr.mxu0 0.0
    %395 = vmatpush1.msra.mxu0 0.0
    %396 = vmatprep.subr.mxu0 0.0
    %397 = vmatpush1.msra.mxu0 0.0
    %398 = vmatprep.subr.mxu0 0.0
    %399 = vmatpush1.msra.mxu0 0.0
    %400 = vmatprep.subr.mxu0 0.0
    %401 = vmatpush1.msra.mxu0 0.0
    %402 = vmatprep.subr.mxu0 0.0
    %403 = vmatpush1.msra.mxu0 0.0
    %404 = vmatprep.subr.mxu0 0.0
    %405 = vmatpush1.msra.mxu0 0.0
    %406 = vmatprep.subr.mxu0 0.0
    %407 = vmatpush1.msra.mxu0 0.0
    %408 = vmatprep.subr.mxu0 0.0
    %409 = vmatpush1.msra.mxu0 0.0
    %410 = vmatprep.subr.mxu0 0.0
    %411 = vmatpush1.msra.mxu0 0.0
    %412 = vmatprep.subr.mxu0 0.0
    %413 = vmatpush1.msra.mxu0 0.0
    %414 = vmatprep.subr.mxu0 0.0
    %415 = vmatpush1.msra.mxu0 0.0
    %416 = vmatprep.subr.mxu0 0.0
    %417 = vmatpush1.msra.mxu0 0.0
    %418 = vmatprep.subr.mxu0 0.0
    %419 = vmatpush1.msra.mxu0 0.0
    %420 = vmatprep.subr.mxu0 0.0
    %421 = vmatpush1.msra.mxu0 0.0
    %422 = vmatprep.subr.mxu0 0.0
    %423 = vmatpush1.msra.mxu0 0.0
    %424 = vmatprep.subr.mxu0 0.0
    %425 = vmatpush1.msra.mxu0 0.0
    %426 = vmatprep.mubr.f32.mxu0 0.0
    %427 = vmatmul.mubr.f32.gmra.mrb[0].mxu0 %v360
    %v428 = vpop.f32.mrb[0].mxu0
    %v429 = vadd.f32 0.0, %v428
    %v430 = vpop.f32.mrb[0].mxu0
    %431 = vdwg.mxu0
    %432 = vrot.lane.b32.xlu0 %v250, 112
    %v433 = vpop.permute.xlu0 %432
    %434 = vrot.lane.b32.xlu0 %v250, 80
    %v435 = vpop.permute.xlu0 %434
    %v436 = vsel %vm81, %v433, 0
    %v438 = vsel %vm81, %v435, 0
    %440 = vmatprep.subr.mxu0 0.0
    %441 = vmatpush1.xpose.msra.mxu0 %v438
    %442 = vmatprep.subr.mxu0 0.0
    %443 = vmatpush1.xpose.msra.mxu0 0.0
    %444 = vmatprep.subr.mxu0 0.0
    %445 = vmatpush1.xpose.msra.mxu0 0.0
    %446 = vmatprep.subr.mxu0 0.0
    %447 = vmatpush1.xpose.msra.mxu0 0.0
    %448 = vmatprep.subr.mxu0 0.0
    %449 = vmatpush1.xpose.msra.mxu0 0.0
    %450 = vmatprep.subr.mxu0 0.0
    %451 = vmatpush1.xpose.msra.mxu0 0.0
    %452 = vmatprep.subr.mxu0 0.0
    %453 = vmatpush1.xpose.msra.mxu0 0.0
    %454 = vmatprep.subr.mxu0 0.0
    %455 = vmatpush1.xpose.msra.mxu0 0.0
    %456 = vmatprep.subr.mxu0 0.0
    %457 = vmatpush1.xpose.msra.mxu0 0.0
    %458 = vmatprep.subr.mxu0 0.0
    %459 = vmatpush1.xpose.msra.mxu0 0.0
    %460 = vmatprep.subr.mxu0 0.0
    %461 = vmatpush1.xpose.msra.mxu0 0.0
    %462 = vmatprep.subr.mxu0 0.0
    %463 = vmatpush1.xpose.msra.mxu0 0.0
    %464 = vmatprep.subr.mxu0 0.0
    %465 = vmatpush1.xpose.msra.mxu0 0.0
    %466 = vmatprep.subr.mxu0 0.0
    %467 = vmatpush1.xpose.msra.mxu0 0.0
    %468 = vmatprep.subr.mxu0 0.0
    %469 = vmatpush1.xpose.msra.mxu0 0.0
    %470 = vmatprep.subr.mxu0 0.0
    %471 = vmatpush1.xpose.msra.mxu0 0.0
    %472 = vmatprep.subr.mxu0 0.0
    %473 = vmatpush1.xpose.msra.mxu0 0.0
    %474 = vmatprep.subr.mxu0 0.0
    %475 = vmatpush1.xpose.msra.mxu0 0.0
    %476 = vmatprep.subr.mxu0 0.0
    %477 = vmatpush1.xpose.msra.mxu0 0.0
    %478 = vmatprep.subr.mxu0 0.0
    %479 = vmatpush1.xpose.msra.mxu0 0.0
    %480 = vmatprep.subr.mxu0 0.0
    %481 = vmatpush1.xpose.msra.mxu0 0.0
    %482 = vmatprep.subr.mxu0 0.0
    %483 = vmatpush1.xpose.msra.mxu0 0.0
    %484 = vmatprep.subr.mxu0 0.0
    %485 = vmatpush1.xpose.msra.mxu0 0.0
    %486 = vmatprep.subr.mxu0 0.0
    %487 = vmatpush1.xpose.msra.mxu0 0.0
    %488 = vmatprep.subr.mxu0 0.0
    %489 = vmatpush1.xpose.msra.mxu0 0.0
    %490 = vmatprep.subr.mxu0 0.0
    %491 = vmatpush1.xpose.msra.mxu0 0.0
    %492 = vmatprep.subr.mxu0 0.0
    %493 = vmatpush1.xpose.msra.mxu0 0.0
    %494 = vmatprep.subr.mxu0 0.0
    %495 = vmatpush1.xpose.msra.mxu0 0.0
    %496 = vmatprep.subr.mxu0 0.0
    %497 = vmatpush1.xpose.msra.mxu0 0.0
    %498 = vmatprep.subr.mxu0 0.0
    %499 = vmatpush1.xpose.msra.mxu0 0.0
    %500 = vmatprep.subr.mxu0 0.0
    %501 = vmatpush1.xpose.msra.mxu0 0.0
    %502 = vmatprep.subr.mxu0 0.0
    %503 = vmatpush1.xpose.msra.mxu0 0.0
    %504 = vmatprep.mubr.f32.mxu0 0.0
    %505 = vmatmul.mubr.f32.gmra.mrb[0].mxu0 %v436
    %v506 = vpop.f32.mrb[0].mxu0
    %v507 = vadd.f32 0.0, %v506
    %v508 = vpop.f32.mrb[0].mxu0
    %509 = vdwg.mxu0
    %v510 = vsel %vm265, %v507, -1e+30
    %v511 = vsel %vm344, %v510, -inf
    %512 = vmax.xlane.f32.xlu0 %v511
    %v513 = vpop.xlane.xlu0 %512
    %v514 = vsub.f32 %v510, %v513
    %v515 = vmul.f32 %v514, 1.442695
    %v516 = vpow.pop %v515
    %v517 = vsel %vm344, %v516, 0.0
    %518 = vadd.xlane.f32.xlu0 %v517
    %v519 = vpop.xlane.xlu0 %518
    %v520 = vrcp.pop %v519
    %v521 = vmul.f32 %v516, %v520
    %522 = vrot.lane.b32.xlu0 %v250, 48
    %v523 = vpop.permute.xlu0 %522
    %v526 = vsel %vm344, %v521, 0
    %528 = vmatprep.subr.mxu0 0.0
    %529 = vmatpush1.msra.mxu0 %v523
    %530 = vmatprep.subr.mxu0 0.0
    %531 = vmatpush1.msra.mxu0 0.0
    %532 = vmatprep.subr.mxu0 0.0
    %533 = vmatpush1.msra.mxu0 0.0
    %534 = vmatprep.subr.mxu0 0.0
    %535 = vmatpush1.msra.mxu0 0.0
    %536 = vmatprep.subr.mxu0 0.0
    %537 = vmatpush1.msra.mxu0 0.0
    %538 = vmatprep.subr.mxu0 0.0
    %539 = vmatpush1.msra.mxu0 0.0
    %540 = vmatprep.subr.mxu0 0.0
    %541 = vmatpush1.msra.mxu0 0.0
    %542 = vmatprep.subr.mxu0 0.0
    %543 = vmatpush1.msra.mxu0 0.0
    %544 = vmatprep.subr.mxu0 0.0
    %545 = vmatpush1.msra.mxu0 0.0
    %546 = vmatprep.subr.mxu0 0.0
    %547 = vmatpush1.msra.mxu0 0.0
    %548 = vmatprep.subr.mxu0 0.0
    %549 = vmatpush1.msra.mxu0 0.0
    %550 = vmatprep.subr.mxu0 0.0
    %551 = vmatpush1.msra.mxu0 0.0
    %552 = vmatprep.subr.mxu0 0.0
    %553 = vmatpush1.msra.mxu0 0.0
    %554 = vmatprep.subr.mxu0 0.0
    %555 = vmatpush1.msra.mxu0 0.0
    %556 = vmatprep.subr.mxu0 0.0
    %557 = vmatpush1.msra.mxu0 0.0
    %558 = vmatprep.subr.mxu0 0.0
    %559 = vmatpush1.msra.mxu0 0.0
    %560 = vmatprep.subr.mxu0 0.0
    %561 = vmatpush1.msra.mxu0 0.0
    %562 = vmatprep.subr.mxu0 0.0
    %563 = vmatpush1.msra.mxu0 0.0
    %564 = vmatprep.subr.mxu0 0.0
    %565 = vmatpush1.msra.mxu0 0.0
    %566 = vmatprep.subr.mxu0 0.0
    %567 = vmatpush1.msra.mxu0 0.0
    %568 = vmatprep.subr.mxu0 0.0
    %569 = vmatpush1.msra.mxu0 0.0
    %570 = vmatprep.subr.mxu0 0.0
    %571 = vmatpush1.msra.mxu0 0.0
    %572 = vmatprep.subr.mxu0 0.0
    %573 = vmatpush1.msra.mxu0 0.0
    %574 = vmatprep.subr.mxu0 0.0
    %575 = vmatpush1.msra.mxu0 0.0
    %576 = vmatprep.subr.mxu0 0.0
    %577 = vmatpush1.msra.mxu0 0.0
    %578 = vmatprep.subr.mxu0 0.0
    %579 = vmatpush1.msra.mxu0 0.0
    %580 = vmatprep.subr.mxu0 0.0
    %581 = vmatpush1.msra.mxu0 0.0
    %582 = vmatprep.subr.mxu0 0.0
    %583 = vmatpush1.msra.mxu0 0.0
    %584 = vmatprep.subr.mxu0 0.0
    %585 = vmatpush1.msra.mxu0 0.0
    %586 = vmatprep.subr.mxu0 0.0
    %587 = vmatpush1.msra.mxu0 0.0
    %588 = vmatprep.subr.mxu0 0.0
    %589 = vmatpush1.msra.mxu0 0.0
    %590 = vmatprep.subr.mxu0 0.0
    %591 = vmatpush1.msra.mxu0 0.0
    %592 = vmatprep.mubr.f32.mxu0 0.0
    %593 = vmatmul.mubr.f32.gmra.mrb[0].mxu0 %v526
    %v594 = vpop.f32.mrb[0].mxu0
    %v595 = vadd.f32 0.0, %v594
    %v596 = vpop.f32.mrb[0].mxu0
    %597 = vdwg.mxu0
    %599 = vrot.lane.b32.xlu0 %v595, 16
    %v600 = vpop.permute.xlu0 %599
    %v602 = vsel %vm81, %v429, %v600
    %604 = vrot.lane.b32.xlu0 %v255, 96
    %v605 = vpop.permute.xlu0 %604
    %v606 = vsel %vm81, %v255, 0
    %v608 = vsel %vm81, %v605, 0
    %610 = vmatprep.subr.mxu0 0.0
    %611 = vmatpush1.xpose.msra.mxu0 %v608
    %612 = vmatprep.subr.mxu0 0.0
    %613 = vmatpush1.xpose.msra.mxu0 0.0
    %614 = vmatprep.subr.mxu0 0.0
    %615 = vmatpush1.xpose.msra.mxu0 0.0
    %616 = vmatprep.subr.mxu0 0.0
    %617 = vmatpush1.xpose.msra.mxu0 0.0
    %618 = vmatprep.subr.mxu0 0.0
    %619 = vmatpush1.xpose.msra.mxu0 0.0
    %620 = vmatprep.subr.mxu0 0.0
    %621 = vmatpush1.xpose.msra.mxu0 0.0
    %622 = vmatprep.subr.mxu0 0.0
    %623 = vmatpush1.xpose.msra.mxu0 0.0
    %624 = vmatprep.subr.mxu0 0.0
    %625 = vmatpush1.xpose.msra.mxu0 0.0
    %626 = vmatprep.subr.mxu0 0.0
    %627 = vmatpush1.xpose.msra.mxu0 0.0
    %628 = vmatprep.subr.mxu0 0.0
    %629 = vmatpush1.xpose.msra.mxu0 0.0
    %630 = vmatprep.subr.mxu0 0.0
    %631 = vmatpush1.xpose.msra.mxu0 0.0
    %632 = vmatprep.subr.mxu0 0.0
    %633 = vmatpush1.xpose.msra.mxu0 0.0
    %634 = vmatprep.subr.mxu0 0.0
    %635 = vmatpush1.xpose.msra.mxu0 0.0
    %636 = vmatprep.subr.mxu0 0.0
    %637 = vmatpush1.xpose.msra.mxu0 0.0
    %638 = vmatprep.subr.mxu0 0.0
    %639 = vmatpush1.xpose.msra.mxu0 0.0
    %640 = vmatprep.subr.mxu0 0.0
    %641 = vmatpush1.xpose.msra.mxu0 0.0
    %642 = vmatprep.subr.mxu0 0.0
    %643 = vmatpush1.xpose.msra.mxu0 0.0
    %644 = vmatprep.subr.mxu0 0.0
    %645 = vmatpush1.xpose.msra.mxu0 0.0
    %646 = vmatprep.subr.mxu0 0.0
    %647 = vmatpush1.xpose.msra.mxu0 0.0
    %648 = vmatprep.subr.mxu0 0.0
    %649 = vmatpush1.xpose.msra.mxu0 0.0
    %650 = vmatprep.subr.mxu0 0.0
    %651 = vmatpush1.xpose.msra.mxu0 0.0
    %652 = vmatprep.subr.mxu0 0.0
    %653 = vmatpush1.xpose.msra.mxu0 0.0
    %654 = vmatprep.subr.mxu0 0.0
    %655 = vmatpush1.xpose.msra.mxu0 0.0
    %656 = vmatprep.subr.mxu0 0.0
    %657 = vmatpush1.xpose.msra.mxu0 0.0
    %658 = vmatprep.subr.mxu0 0.0
    %659 = vmatpush1.xpose.msra.mxu0 0.0
    %660 = vmatprep.subr.mxu0 0.0
    %661 = vmatpush1.xpose.msra.mxu0 0.0
    %662 = vmatprep.subr.mxu0 0.0
    %663 = vmatpush1.xpose.msra.mxu0 0.0
    %664 = vmatprep.subr.mxu0 0.0
    %665 = vmatpush1.xpose.msra.mxu0 0.0
    %666 = vmatprep.subr.mxu0 0.0
    %667 = vmatpush1.xpose.msra.mxu0 0.0
    %668 = vmatprep.subr.mxu0 0.0
    %669 = vmatpush1.xpose.msra.mxu0 0.0
    %670 = vmatprep.subr.mxu0 0.0
    %671 = vmatpush1.xpose.msra.mxu0 0.0
    %672 = vmatprep.subr.mxu0 0.0
    %673 = vmatpush1.xpose.msra.mxu0 0.0
    %674 = vmatprep.mubr.f32.mxu0 0.0
    %675 = vmatmul.mubr.f32.gmra.mrb[0].mxu0 %v606
    %v676 = vpop.f32.mrb[0].mxu0
    %v677 = vadd.f32 0.0, %v676
    %v678 = vpop.f32.mrb[0].mxu0
    %679 = vdwg.mxu0
    %v680 = vsel %vm265, %v677, -1e+30
    %v681 = vsel %vm344, %v680, -inf
    %682 = vmax.xlane.f32.xlu0 %v681
    %v683 = vpop.xlane.xlu0 %682
    %v684 = vsub.f32 %v680, %v683
    %v685 = vmul.f32 %v684, 1.442695
    %v686 = vpow.pop %v685
    %v687 = vsel %vm344, %v686, 0.0
    %688 = vadd.xlane.f32.xlu0 %v687
    %v689 = vpop.xlane.xlu0 %688
    %v690 = vrcp.pop %v689
    %v691 = vmul.f32 %v686, %v690
    %692 = vrot.lane.b32.xlu0 %v255, 64
    %v693 = vpop.permute.xlu0 %692
    %v696 = vsel %vm344, %v691, 0
    %698 = vmatprep.subr.mxu0 0.0
    %699 = vmatpush1.msra.mxu0 %v693
    %700 = vmatprep.subr.mxu0 0.0
    %701 = vmatpush1.msra.mxu0 0.0
    %702 = vmatprep.subr.mxu0 0.0
    %703 = vmatpush1.msra.mxu0 0.0
    %704 = vmatprep.subr.mxu0 0.0
    %705 = vmatpush1.msra.mxu0 0.0
    %706 = vmatprep.subr.mxu0 0.0
    %707 = vmatpush1.msra.mxu0 0.0
    %708 = vmatprep.subr.mxu0 0.0
    %709 = vmatpush1.msra.mxu0 0.0
    %710 = vmatprep.subr.mxu0 0.0
    %711 = vmatpush1.msra.mxu0 0.0
    %712 = vmatprep.subr.mxu0 0.0
    %713 = vmatpush1.msra.mxu0 0.0
    %714 = vmatprep.subr.mxu0 0.0
    %715 = vmatpush1.msra.mxu0 0.0
    %716 = vmatprep.subr.mxu0 0.0
    %717 = vmatpush1.msra.mxu0 0.0
    %718 = vmatprep.subr.mxu0 0.0
    %719 = vmatpush1.msra.mxu0 0.0
    %720 = vmatprep.subr.mxu0 0.0
    %721 = vmatpush1.msra.mxu0 0.0
    %722 = vmatprep.subr.mxu0 0.0
    %723 = vmatpush1.msra.mxu0 0.0
    %724 = vmatprep.subr.mxu0 0.0
    %725 = vmatpush1.msra.mxu0 0.0
    %726 = vmatprep.subr.mxu0 0.0
    %727 = vmatpush1.msra.mxu0 0.0
    %728 = vmatprep.subr.mxu0 0.0
    %729 = vmatpush1.msra.mxu0 0.0
    %730 = vmatprep.subr.mxu0 0.0
    %731 = vmatpush1.msra.mxu0 0.0
    %732 = vmatprep.subr.mxu0 0.0
    %733 = vmatpush1.msra.mxu0 0.0
    %734 = vmatprep.subr.mxu0 0.0
    %735 = vmatpush1.msra.mxu0 0.0
    %736 = vmatprep.subr.mxu0 0.0
    %737 = vmatpush1.msra.mxu0 0.0
    %738 = vmatprep.subr.mxu0 0.0
    %739 = vmatpush1.msra.mxu0 0.0
    %740 = vmatprep.subr.mxu0 0.0
    %741 = vmatpush1.msra.mxu0 0.0
    %742 = vmatprep.subr.mxu0 0.0
    %743 = vmatpush1.msra.mxu0 0.0
    %744 = vmatprep.subr.mxu0 0.0
    %745 = vmatpush1.msra.mxu0 0.0
    %746 = vmatprep.subr.mxu0 0.0
    %747 = vmatpush1.msra.mxu0 0.0
    %748 = vmatprep.subr.mxu0 0.0
    %749 = vmatpush1.msra.mxu0 0.0
    %750 = vmatprep.subr.mxu0 0.0
    %751 = vmatpush1.msra.mxu0 0.0
    %752 = vmatprep.subr.mxu0 0.0
    %753 = vmatpush1.msra.mxu0 0.0
    %754 = vmatprep.subr.mxu0 0.0
    %755 = vmatpush1.msra.mxu0 0.0
    %756 = vmatprep.subr.mxu0 0.0
    %757 = vmatpush1.msra.mxu0 0.0
    %758 = vmatprep.subr.mxu0 0.0
    %759 = vmatpush1.msra.mxu0 0.0
    %760 = vmatprep.subr.mxu0 0.0
    %761 = vmatpush1.msra.mxu0 0.0
    %762 = vmatprep.mubr.f32.mxu0 0.0
    %763 = vmatmul.mubr.f32.gmra.mrb[0].mxu0 %v696
    %v764 = vpop.f32.mrb[0].mxu0
    %v765 = vadd.f32 0.0, %v764
    %v766 = vpop.f32.mrb[0].mxu0
    %767 = vdwg.mxu0
    %768 = vrot.lane.b32.xlu0 %v255, 112
    %v769 = vpop.permute.xlu0 %768
    %770 = vrot.lane.b32.xlu0 %v255, 80
    %v771 = vpop.permute.xlu0 %770
    %v772 = vsel %vm81, %v769, 0
    %v774 = vsel %vm81, %v771, 0
    %776 = vmatprep.subr.mxu0 0.0
    %777 = vmatpush1.xpose.msra.mxu0 %v774
    %778 = vmatprep.subr.mxu0 0.0
    %779 = vmatpush1.xpose.msra.mxu0 0.0
    %780 = vmatprep.subr.mxu0 0.0
    %781 = vmatpush1.xpose.msra.mxu0 0.0
    %782 = vmatprep.subr.mxu0 0.0
    %783 = vmatpush1.xpose.msra.mxu0 0.0
    %784 = vmatprep.subr.mxu0 0.0
    %785 = vmatpush1.xpose.msra.mxu0 0.0
    %786 = vmatprep.subr.mxu0 0.0
    %787 = vmatpush1.xpose.msra.mxu0 0.0
    %788 = vmatprep.subr.mxu0 0.0
    %789 = vmatpush1.xpose.msra.mxu0 0.0
    %790 = vmatprep.subr.mxu0 0.0
    %791 = vmatpush1.xpose.msra.mxu0 0.0
    %792 = vmatprep.subr.mxu0 0.0
    %793 = vmatpush1.xpose.msra.mxu0 0.0
    %794 = vmatprep.subr.mxu0 0.0
    %795 = vmatpush1.xpose.msra.mxu0 0.0
    %796 = vmatprep.subr.mxu0 0.0
    %797 = vmatpush1.xpose.msra.mxu0 0.0
    %798 = vmatprep.subr.mxu0 0.0
    %799 = vmatpush1.xpose.msra.mxu0 0.0
    %800 = vmatprep.subr.mxu0 0.0
    %801 = vmatpush1.xpose.msra.mxu0 0.0
    %802 = vmatprep.subr.mxu0 0.0
    %803 = vmatpush1.xpose.msra.mxu0 0.0
    %804 = vmatprep.subr.mxu0 0.0
    %805 = vmatpush1.xpose.msra.mxu0 0.0
    %806 = vmatprep.subr.mxu0 0.0
    %807 = vmatpush1.xpose.msra.mxu0 0.0
    %808 = vmatprep.subr.mxu0 0.0
    %809 = vmatpush1.xpose.msra.mxu0 0.0
    %810 = vmatprep.subr.mxu0 0.0
    %811 = vmatpush1.xpose.msra.mxu0 0.0
    %812 = vmatprep.subr.mxu0 0.0
    %813 = vmatpush1.xpose.msra.mxu0 0.0
    %814 = vmatprep.subr.mxu0 0.0
    %815 = vmatpush1.xpose.msra.mxu0 0.0
    %816 = vmatprep.subr.mxu0 0.0
    %817 = vmatpush1.xpose.msra.mxu0 0.0
    %818 = vmatprep.subr.mxu0 0.0
    %819 = vmatpush1.xpose.msra.mxu0 0.0
    %820 = vmatprep.subr.mxu0 0.0
    %821 = vmatpush1.xpose.msra.mxu0 0.0
    %822 = vmatprep.subr.mxu0 0.0
    %823 = vmatpush1.xpose.msra.mxu0 0.0
    %824 = vmatprep.subr.mxu0 0.0
    %825 = vmatpush1.xpose.msra.mxu0 0.0
    %826 = vmatprep.subr.mxu0 0.0
    %827 = vmatpush1.xpose.msra.mxu0 0.0
    %828 = vmatprep.subr.mxu0 0.0
    %829 = vmatpush1.xpose.msra.mxu0 0.0
    %830 = vmatprep.subr.mxu0 0.0
    %831 = vmatpush1.xpose.msra.mxu0 0.0
    %832 = vmatprep.subr.mxu0 0.0
    %833 = vmatpush1.xpose.msra.mxu0 0.0
    %834 = vmatprep.subr.mxu0 0.0
    %835 = vmatpush1.xpose.msra.mxu0 0.0
    %836 = vmatprep.subr.mxu0 0.0
    %837 = vmatpush1.xpose.msra.mxu0 0.0
    %838 = vmatprep.subr.mxu0 0.0
    %839 = vmatpush1.xpose.msra.mxu0 0.0
    %840 = vmatprep.mubr.f32.mxu0 0.0
    %841 = vmatmul.mubr.f32.gmra.mrb[0].mxu0 %v772
    %v842 = vpop.f32.mrb[0].mxu0
    %v843 = vadd.f32 0.0, %v842
    %v844 = vpop.f32.mrb[0].mxu0
    %845 = vdwg.mxu0
    %v846 = vsel %vm265, %v843, -1e+30
    %v847 = vsel %vm344, %v846, -inf
    %848 = vmax.xlane.f32.xlu0 %v847
    %v849 = vpop.xlane.xlu0 %848
    %v850 = vsub.f32 %v846, %v849
    %v851 = vmul.f32 %v850, 1.442695
    %v852 = vpow.pop %v851
    %v853 = vsel %vm344, %v852, 0.0
    %854 = vadd.xlane.f32.xlu0 %v853
    %v855 = vpop.xlane.xlu0 %854
    %v856 = vrcp.pop %v855
    %v857 = vmul.f32 %v852, %v856
    %858 = vrot.lane.b32.xlu0 %v255, 48
    %v859 = vpop.permute.xlu0 %858
    %v862 = vsel %vm344, %v857, 0
    %864 = vmatprep.subr.mxu0 0.0
    %865 = vmatpush1.msra.mxu0 %v859
    %866 = vmatprep.subr.mxu0 0.0
    %867 = vmatpush1.msra.mxu0 0.0
    %868 = vmatprep.subr.mxu0 0.0
    %869 = vmatpush1.msra.mxu0 0.0
    %870 = vmatprep.subr.mxu0 0.0
    %871 = vmatpush1.msra.mxu0 0.0
    %872 = vmatprep.subr.mxu0 0.0
    %873 = vmatpush1.msra.mxu0 0.0
    %874 = vmatprep.subr.mxu0 0.0
    %875 = vmatpush1.msra.mxu0 0.0
    %876 = vmatprep.subr.mxu0 0.0
    %877 = vmatpush1.msra.mxu0 0.0
    %878 = vmatprep.subr.mxu0 0.0
    %879 = vmatpush1.msra.mxu0 0.0
    %880 = vmatprep.subr.mxu0 0.0
    %881 = vmatpush1.msra.mxu0 0.0
    %882 = vmatprep.subr.mxu0 0.0
    %883 = vmatpush1.msra.mxu0 0.0
    %884 = vmatprep.subr.mxu0 0.0
    %885 = vmatpush1.msra.mxu0 0.0
    %886 = vmatprep.subr.mxu0 0.0
    %887 = vmatpush1.msra.mxu0 0.0
    %888 = vmatprep.subr.mxu0 0.0
    %889 = vmatpush1.msra.mxu0 0.0
    %890 = vmatprep.subr.mxu0 0.0
    %891 = vmatpush1.msra.mxu0 0.0
    %892 = vmatprep.subr.mxu0 0.0
    %893 = vmatpush1.msra.mxu0 0.0
    %894 = vmatprep.subr.mxu0 0.0
    %895 = vmatpush1.msra.mxu0 0.0
    %896 = vmatprep.subr.mxu0 0.0
    %897 = vmatpush1.msra.mxu0 0.0
    %898 = vmatprep.subr.mxu0 0.0
    %899 = vmatpush1.msra.mxu0 0.0
    %900 = vmatprep.subr.mxu0 0.0
    %901 = vmatpush1.msra.mxu0 0.0
    %902 = vmatprep.subr.mxu0 0.0
    %903 = vmatpush1.msra.mxu0 0.0
    %904 = vmatprep.subr.mxu0 0.0
    %905 = vmatpush1.msra.mxu0 0.0
    %906 = vmatprep.subr.mxu0 0.0
    %907 = vmatpush1.msra.mxu0 0.0
    %908 = vmatprep.subr.mxu0 0.0
    %909 = vmatpush1.msra.mxu0 0.0
    %910 = vmatprep.subr.mxu0 0.0
    %911 = vmatpush1.msra.mxu0 0.0
    %912 = vmatprep.subr.mxu0 0.0
    %913 = vmatpush1.msra.mxu0 0.0
    %914 = vmatprep.subr.mxu0 0.0
    %915 = vmatpush1.msra.mxu0 0.0
    %916 = vmatprep.subr.mxu0 0.0
    %917 = vmatpush1.msra.mxu0 0.0
    %918 = vmatprep.subr.mxu0 0.0
    %919 = vmatpush1.msra.mxu0 0.0
    %920 = vmatprep.subr.mxu0 0.0
    %921 = vmatpush1.msra.mxu0 0.0
    %922 = vmatprep.subr.mxu0 0.0
    %923 = vmatpush1.msra.mxu0 0.0
    %924 = vmatprep.subr.mxu0 0.0
    %925 = vmatpush1.msra.mxu0 0.0
    %926 = vmatprep.subr.mxu0 0.0
    %927 = vmatpush1.msra.mxu0 0.0
    %928 = vmatprep.mubr.f32.mxu0 0.0
    %929 = vmatmul.mubr.f32.gmra.mrb[0].mxu0 %v862
    %v930 = vpop.f32.mrb[0].mxu0
    %v931 = vadd.f32 0.0, %v930
    %v932 = vpop.f32.mrb[0].mxu0
    %933 = vdwg.mxu0
    %935 = vrot.lane.b32.xlu0 %v931, 16
    %v936 = vpop.permute.xlu0 %935
    %v938 = vsel %vm81, %v765, %v936
    %v939 = vlaneseq
    %v940 = vshrl.u32 %v939, 7
    %v941 = vsub.s32 2, %v940
    %v942 = vrot.slane %v66, %v941
    %v944 = vsel %vm176, %v602, 0
    %v947 = vsel %vm176, %v938, 0
    %949 = vmatprep.subr.mxu0 0.0
    %950 = vmatpush1.msra.mxu0 %v59
    %951 = vmatprep.subr.mxu0 0.0
    %952 = vmatpush1.msra.mxu0 %v61
    %953 = vmatprep.subr.mxu0 0.0
    %954 = vmatpush1.msra.mxu0 %v63
    %955 = vmatprep.subr.mxu0 0.0
    %956 = vmatpush1.msra.mxu0 %v65
    %957 = vmatprep.subr.mxu0 0.0
    %958 = vmatpush1.msra.mxu0 0.0
    %959 = vmatprep.subr.mxu0 0.0
    %960 = vmatpush1.msra.mxu0 0.0
    %961 = vmatprep.subr.mxu0 0.0
    %962 = vmatpush1.msra.mxu0 0.0
    %963 = vmatprep.subr.mxu0 0.0
    %964 = vmatpush1.msra.mxu0 0.0
    %965 = vmatprep.subr.mxu0 0.0
    %966 = vmatpush1.msra.mxu0 0.0
    %967 = vmatprep.subr.mxu0 0.0
    %968 = vmatpush1.msra.mxu0 0.0
    %969 = vmatprep.subr.mxu0 0.0
    %970 = vmatpush1.msra.mxu0 0.0
    %971 = vmatprep.subr.mxu0 0.0
    %972 = vmatpush1.msra.mxu0 0.0
    %973 = vmatprep.subr.mxu0 0.0
    %974 = vmatpush1.msra.mxu0 0.0
    %975 = vmatprep.subr.mxu0 0.0
    %976 = vmatpush1.msra.mxu0 0.0
    %977 = vmatprep.subr.mxu0 0.0
    %978 = vmatpush1.msra.mxu0 0.0
    %979 = vmatprep.subr.mxu0 0.0
    %980 = vmatpush1.msra.mxu0 0.0
    %981 = vmatprep.subr.mxu0 0.0
    %982 = vmatpush1.msra.mxu0 0.0
    %983 = vmatprep.subr.mxu0 0.0
    %984 = vmatpush1.msra.mxu0 0.0
    %985 = vmatprep.subr.mxu0 0.0
    %986 = vmatpush1.msra.mxu0 0.0
    %987 = vmatprep.subr.mxu0 0.0
    %988 = vmatpush1.msra.mxu0 0.0
    %989 = vmatprep.subr.mxu0 0.0
    %990 = vmatpush1.msra.mxu0 0.0
    %991 = vmatprep.subr.mxu0 0.0
    %992 = vmatpush1.msra.mxu0 0.0
    %993 = vmatprep.subr.mxu0 0.0
    %994 = vmatpush1.msra.mxu0 0.0
    %995 = vmatprep.subr.mxu0 0.0
    %996 = vmatpush1.msra.mxu0 0.0
    %997 = vmatprep.subr.mxu0 0.0
    %998 = vmatpush1.msra.mxu0 0.0
    %999 = vmatprep.subr.mxu0 0.0
    %1000 = vmatpush1.msra.mxu0 0.0
    %1001 = vmatprep.subr.mxu0 0.0
    %1002 = vmatpush1.msra.mxu0 0.0
    %1003 = vmatprep.subr.mxu0 0.0
    %1004 = vmatpush1.msra.mxu0 0.0
    %1005 = vmatprep.subr.mxu0 0.0
    %1006 = vmatpush1.msra.mxu0 0.0
    %1007 = vmatprep.subr.mxu0 0.0
    %1008 = vmatpush1.msra.mxu0 0.0
    %1009 = vmatprep.subr.mxu0 0.0
    %1010 = vmatpush1.msra.mxu0 0.0
    %1011 = vmatprep.subr.mxu0 0.0
    %1012 = vmatpush1.msra.mxu0 0.0
    %1013 = vmatprep.mubr.f32.mxu0 0.0
    %1014 = vmatmul.mubr.f32.gmra.mrb[0].mxu0 %v944
    %v1015 = vpop.f32.mrb[0].mxu0
    %v1016 = vadd.f32 %v942, %v1015
    %v1017 = vpop.f32.mrb[0].mxu0
    %1018 = vmatprep.mubr.f32.mxu0 0.0
    %1019 = vmatmul.mubr.f32.gmra.mrb[0].mxu0 %v947
    %v1020 = vpop.f32.mrb[0].mxu0
    %v1021 = vadd.f32 %v942, %v1020
    %v1022 = vpop.f32.mrb[0].mxu0
    %1023 = vdwg.mxu0
    %v1024 = vadd.f32 %v170, %v1016
    %v1025 = vadd.f32 %v171, %v1021
    %v1026 = vsel %vm176, %v1024, 0.0
    %1027 = vadd.xlane.f32.xlu0 %v1026
    %v1028 = vpop.xlane.xlu0 %1027
    %v1029 = vsel %vm176, %v1025, 0.0
    %1030 = vadd.xlane.f32.xlu0 %v1029
    %v1031 = vpop.xlane.xlu0 %1030
    %v1032 = vrcp.pop 32.0
    %v1033 = vmul.f32 %v1028, %v1032
    %v1034 = vmul.f32 %v1031, %v1032
    %v1035 = vsub.f32 %v1024, %v1033
    %v1036 = vsub.f32 %v1025, %v1034
    %v1037 = vmul.f32 %v1035, %v1035
    %v1038 = vmul.f32 %v1036, %v1036
    %v1039 = vsel %vm176, %v1037, 0.0
    %1040 = vadd.xlane.f32.xlu0 %v1039
    %v1041 = vpop.xlane.xlu0 %1040
    %v1042 = vsel %vm176, %v1038, 0.0
    %1043 = vadd.xlane.f32.xlu0 %v1042
    %v1044 = vpop.xlane.xlu0 %1043
    %v1045 = vmul.f32 %v1041, %v1032
    %v1046 = vmul.f32 %v1044, %v1032
    %v1047 = vadd.f32 %v1045, 1e-05
    %v1048 = vadd.f32 %v1046, 1e-05
    %v1049 = vrsqrt.pop %v1047
    %v1050 = vrsqrt.pop %v1048
    %v1051 = vmul.f32 %v1035, %v1049
    %v1052 = vmul.f32 %v1036, %v1050
    %v1053 = vlaneseq
    %v1054 = vshrl.u32 %v1053, 7
    %v1055 = vsub.s32 3, %v1054
    %v1056 = vrot.slane %v66, %v1055
    %v1057 = vmul.f32 %v1051, %v1056
    %v1058 = vmul.f32 %v1052, %v1056
    %v1059 = vlaneseq
    %v1060 = vshrl.u32 %v1059, 7
    %v1061 = vsub.s32 4, %v1060
    %v1062 = vrot.slane %v66, %v1061
    %v1063 = vadd.f32 %v1057, %v1062
    %v1064 = vadd.f32 %v1058, %v1062
    %v1065 = vlaneseq
    %v1066 = vshrl.u32 %v1065, 7
    %v1067 = vsub.s32 5, %v1066
    %v1068 = vrot.slane %v66, %v1067
    %1073 = vrot.lane.b32.xlu0 %v59, 96
    %v1074 = vpop.permute.xlu0 %1073
    %1075 = vrot.lane.b32.xlu0 %v61, 96
    %v1076 = vpop.permute.xlu0 %1075
    %1077 = vrot.lane.b32.xlu0 %v63, 96
    %v1078 = vpop.permute.xlu0 %1077
    %1079 = vrot.lane.b32.xlu0 %v65, 96
    %v1080 = vpop.permute.xlu0 %1079
    %v1086 = vsel %vm176, %v1063, 0
    %v1089 = vsel %vm176, %v1064, 0
    %1091 = vmatprep.subr.mxu0 0.0
    %1092 = vmatpush1.msra.mxu0 %v1074
    %1093 = vmatprep.subr.mxu0 0.0
    %1094 = vmatpush1.msra.mxu0 %v1076
    %1095 = vmatprep.subr.mxu0 0.0
    %1096 = vmatpush1.msra.mxu0 %v1078
    %1097 = vmatprep.subr.mxu0 0.0
    %1098 = vmatpush1.msra.mxu0 %v1080
    %1099 = vmatprep.subr.mxu0 0.0
    %1100 = vmatpush1.msra.mxu0 0.0
    %1101 = vmatprep.subr.mxu0 0.0
    %1102 = vmatpush1.msra.mxu0 0.0
    %1103 = vmatprep.subr.mxu0 0.0
    %1104 = vmatpush1.msra.mxu0 0.0
    %1105 = vmatprep.subr.mxu0 0.0
    %1106 = vmatpush1.msra.mxu0 0.0
    %1107 = vmatprep.subr.mxu0 0.0
    %1108 = vmatpush1.msra.mxu0 0.0
    %1109 = vmatprep.subr.mxu0 0.0
    %1110 = vmatpush1.msra.mxu0 0.0
    %1111 = vmatprep.subr.mxu0 0.0
    %1112 = vmatpush1.msra.mxu0 0.0
    %1113 = vmatprep.subr.mxu0 0.0
    %1114 = vmatpush1.msra.mxu0 0.0
    %1115 = vmatprep.subr.mxu0 0.0
    %1116 = vmatpush1.msra.mxu0 0.0
    %1117 = vmatprep.subr.mxu0 0.0
    %1118 = vmatpush1.msra.mxu0 0.0
    %1119 = vmatprep.subr.mxu0 0.0
    %1120 = vmatpush1.msra.mxu0 0.0
    %1121 = vmatprep.subr.mxu0 0.0
    %1122 = vmatpush1.msra.mxu0 0.0
    %1123 = vmatprep.subr.mxu0 0.0
    %1124 = vmatpush1.msra.mxu0 0.0
    %1125 = vmatprep.subr.mxu0 0.0
    %1126 = vmatpush1.msra.mxu0 0.0
    %1127 = vmatprep.subr.mxu0 0.0
    %1128 = vmatpush1.msra.mxu0 0.0
    %1129 = vmatprep.subr.mxu0 0.0
    %1130 = vmatpush1.msra.mxu0 0.0
    %1131 = vmatprep.subr.mxu0 0.0
    %1132 = vmatpush1.msra.mxu0 0.0
    %1133 = vmatprep.subr.mxu0 0.0
    %1134 = vmatpush1.msra.mxu0 0.0
    %1135 = vmatprep.subr.mxu0 0.0
    %1136 = vmatpush1.msra.mxu0 0.0
    %1137 = vmatprep.subr.mxu0 0.0
    %1138 = vmatpush1.msra.mxu0 0.0
    %1139 = vmatprep.subr.mxu0 0.0
    %1140 = vmatpush1.msra.mxu0 0.0
    %1141 = vmatprep.subr.mxu0 0.0
    %1142 = vmatpush1.msra.mxu0 0.0
    %1143 = vmatprep.subr.mxu0 0.0
    %1144 = vmatpush1.msra.mxu0 0.0
    %1145 = vmatprep.subr.mxu0 0.0
    %1146 = vmatpush1.msra.mxu0 0.0
    %1147 = vmatprep.subr.mxu0 0.0
    %1148 = vmatpush1.msra.mxu0 0.0
    %1149 = vmatprep.subr.mxu0 0.0
    %1150 = vmatpush1.msra.mxu0 0.0
    %1151 = vmatprep.subr.mxu0 0.0
    %1152 = vmatpush1.msra.mxu0 0.0
    %1153 = vmatprep.subr.mxu0 0.0
    %1154 = vmatpush1.msra.mxu0 0.0
    %1155 = vmatprep.mubr.f32.mxu0 0.0
    %1156 = vmatmul.mubr.f32.gmra.mrb[0].mxu0 %v1086
    %v1157 = vpop.f32.mrb[0].mxu0
    %v1158 = vadd.f32 %v1068, %v1157
    %v1159 = vpop.f32.mrb[0].mxu0
    %1160 = vmatprep.mubr.f32.mxu0 0.0
    %1161 = vmatmul.mubr.f32.gmra.mrb[0].mxu0 %v1089
    %v1162 = vpop.f32.mrb[0].mxu0
    %v1163 = vadd.f32 %v1068, %v1162
    %v1164 = vpop.f32.mrb[0].mxu0
    %1165 = vdwg.mxu0
    %v1166 = vmax.f32 %v1158, 0.0
    %v1167 = vmax.f32 %v1163, 0.0
    %v1168 = vlaneseq
    %v1169 = vshrl.u32 %v1168, 7
    %v1170 = vsub.s32 6, %v1169
    %v1171 = vrot.slane %v66, %v1170
    %1172 = vrot.lane.b32.xlu0 %v59, 64
    %v1173 = vpop.permute.xlu0 %1172
    %1174 = vrot.lane.b32.xlu0 %v61, 64
    %v1175 = vpop.permute.xlu0 %1174
    %1176 = vrot.lane.b32.xlu0 %v63, 64
    %v1177 = vpop.permute.xlu0 %1176
    %1178 = vrot.lane.b32.xlu0 %v65, 64
    %v1179 = vpop.permute.xlu0 %1178
    %v1185 = vsel %vm176, %v1166, 0
    %v1188 = vsel %vm176, %v1167, 0
    %1190 = vmatprep.subr.mxu0 0.0
    %1191 = vmatpush1.msra.mxu0 %v1173
    %1192 = vmatprep.subr.mxu0 0.0
    %1193 = vmatpush1.msra.mxu0 %v1175
    %1194 = vmatprep.subr.mxu0 0.0
    %1195 = vmatpush1.msra.mxu0 %v1177
    %1196 = vmatprep.subr.mxu0 0.0
    %1197 = vmatpush1.msra.mxu0 %v1179
    %1198 = vmatprep.subr.mxu0 0.0
    %1199 = vmatpush1.msra.mxu0 0.0
    %1200 = vmatprep.subr.mxu0 0.0
    %1201 = vmatpush1.msra.mxu0 0.0
    %1202 = vmatprep.subr.mxu0 0.0
    %1203 = vmatpush1.msra.mxu0 0.0
    %1204 = vmatprep.subr.mxu0 0.0
    %1205 = vmatpush1.msra.mxu0 0.0
    %1206 = vmatprep.subr.mxu0 0.0
    %1207 = vmatpush1.msra.mxu0 0.0
    %1208 = vmatprep.subr.mxu0 0.0
    %1209 = vmatpush1.msra.mxu0 0.0
    %1210 = vmatprep.subr.mxu0 0.0
    %1211 = vmatpush1.msra.mxu0 0.0
    %1212 = vmatprep.subr.mxu0 0.0
    %1213 = vmatpush1.msra.mxu0 0.0
    %1214 = vmatprep.subr.mxu0 0.0
    %1215 = vmatpush1.msra.mxu0 0.0
    %1216 = vmatprep.subr.mxu0 0.0
    %1217 = vmatpush1.msra.mxu0 0.0
    %1218 = vmatprep.subr.mxu0 0.0
    %1219 = vmatpush1.msra.mxu0 0.0
    %1220 = vmatprep.subr.mxu0 0.0
    %1221 = vmatpush1.msra.mxu0 0.0
    %1222 = vmatprep.subr.mxu0 0.0
    %1223 = vmatpush1.msra.mxu0 0.0
    %1224 = vmatprep.subr.mxu0 0.0
    %1225 = vmatpush1.msra.mxu0 0.0
    %1226 = vmatprep.subr.mxu0 0.0
    %1227 = vmatpush1.msra.mxu0 0.0
    %1228 = vmatprep.subr.mxu0 0.0
    %1229 = vmatpush1.msra.mxu0 0.0
    %1230 = vmatprep.subr.mxu0 0.0
    %1231 = vmatpush1.msra.mxu0 0.0
    %1232 = vmatprep.subr.mxu0 0.0
    %1233 = vmatpush1.msra.mxu0 0.0
    %1234 = vmatprep.subr.mxu0 0.0
    %1235 = vmatpush1.msra.mxu0 0.0
    %1236 = vmatprep.subr.mxu0 0.0
    %1237 = vmatpush1.msra.mxu0 0.0
    %1238 = vmatprep.subr.mxu0 0.0
    %1239 = vmatpush1.msra.mxu0 0.0
    %1240 = vmatprep.subr.mxu0 0.0
    %1241 = vmatpush1.msra.mxu0 0.0
    %1242 = vmatprep.subr.mxu0 0.0
    %1243 = vmatpush1.msra.mxu0 0.0
    %1244 = vmatprep.subr.mxu0 0.0
    %1245 = vmatpush1.msra.mxu0 0.0
    %1246 = vmatprep.subr.mxu0 0.0
    %1247 = vmatpush1.msra.mxu0 0.0
    %1248 = vmatprep.subr.mxu0 0.0
    %1249 = vmatpush1.msra.mxu0 0.0
    %1250 = vmatprep.subr.mxu0 0.0
    %1251 = vmatpush1.msra.mxu0 0.0
    %1252 = vmatprep.subr.mxu0 0.0
    %1253 = vmatpush1.msra.mxu0 0.0
    %1254 = vmatprep.mubr.f32.mxu0 0.0
    %1255 = vmatmul.mubr.f32.gmra.mrb[0].mxu0 %v1185
    %v1256 = vpop.f32.mrb[0].mxu0
    %v1257 = vadd.f32 %v1171, %v1256
    %v1258 = vpop.f32.mrb[0].mxu0
    %1259 = vmatprep.mubr.f32.mxu0 0.0
    %1260 = vmatmul.mubr.f32.gmra.mrb[0].mxu0 %v1188
    %v1261 = vpop.f32.mrb[0].mxu0
    %v1262 = vadd.f32 %v1171, %v1261
    %v1263 = vpop.f32.mrb[0].mxu0
    %1264 = vdwg.mxu0
    %v1265 = vadd.f32 %v1063, %v1257
    %v1266 = vadd.f32 %v1064, %v1262
    %v1267 = vsel %vm176, %v1265, 0.0
    %1268 = vadd.xlane.f32.xlu0 %v1267
    %v1269 = vpop.xlane.xlu0 %1268
    %v1270 = vsel %vm176, %v1266, 0.0
    %1271 = vadd.xlane.f32.xlu0 %v1270
    %v1272 = vpop.xlane.xlu0 %1271
    %v1273 = vmul.f32 %v1269, %v1032
    %v1274 = vmul.f32 %v1272, %v1032
    %v1275 = vsub.f32 %v1265, %v1273
    %v1276 = vsub.f32 %v1266, %v1274
    %v1277 = vmul.f32 %v1275, %v1275
    %v1278 = vmul.f32 %v1276, %v1276
    %v1279 = vsel %vm176, %v1277, 0.0
    %1280 = vadd.xlane.f32.xlu0 %v1279
    %v1281 = vpop.xlane.xlu0 %1280
    %v1282 = vsel %vm176, %v1278, 0.0
    %1283 = vadd.xlane.f32.xlu0 %v1282
    %v1284 = vpop.xlane.xlu0 %1283
    %v1285 = vmul.f32 %v1281, %v1032
    %v1286 = vmul.f32 %v1284, %v1032
    %v1287 = vadd.f32 %v1285, 1e-05
    %v1288 = vadd.f32 %v1286, 1e-05
    %v1289 = vrsqrt.pop %v1287
    %v1290 = vrsqrt.pop %v1288
    %v1291 = vmul.f32 %v1275, %v1289
    %v1292 = vmul.f32 %v1276, %v1290
    %v1293 = vlaneseq
    %v1294 = vshrl.u32 %v1293, 7
    %v1295 = vsub.s32 7, %v1294
    %v1296 = vrot.slane %v66, %v1295
    %v1297 = vmul.f32 %v1291, %v1296
    %v1298 = vmul.f32 %v1292, %v1296
    %v1299 = vlaneseq
    %v1300 = vshrl.u32 %v1299, 7
    %v1301 = vsub.s32 0, %v1300
    %v1302 = vrot.slane %v67, %v1301
    %v1303 = vadd.f32 %v1297, %v1302
    %v1304 = vadd.f32 %v1298, %v1302
    %v1305 = vlaneseq
    %v1306 = vshrl.u32 %v1305, 7
    %v1307 = vsub.s32 1, %v1306
    %v1308 = vrot.slane %v67, %v1307
    %1309 = vrot.lane.b32.xlu0 %v59, 32
    %v1310 = vpop.permute.xlu0 %1309
    %1311 = vrot.lane.b32.xlu0 %v61, 32
    %v1312 = vpop.permute.xlu0 %1311
    %1313 = vrot.lane.b32.xlu0 %v63, 32
    %v1314 = vpop.permute.xlu0 %1313
    %1315 = vrot.lane.b32.xlu0 %v65, 32
    %v1316 = vpop.permute.xlu0 %1315
    %v1322 = vsel %vm176, %v1303, 0
    %v1325 = vsel %vm176, %v1304, 0
    %1327 = vmatprep.subr.mxu0 0.0
    %1328 = vmatpush1.msra.mxu0 %v1310
    %1329 = vmatprep.subr.mxu0 0.0
    %1330 = vmatpush1.msra.mxu0 %v1312
    %1331 = vmatprep.subr.mxu0 0.0
    %1332 = vmatpush1.msra.mxu0 %v1314
    %1333 = vmatprep.subr.mxu0 0.0
    %1334 = vmatpush1.msra.mxu0 %v1316
    %1335 = vmatprep.subr.mxu0 0.0
    %1336 = vmatpush1.msra.mxu0 0.0
    %1337 = vmatprep.subr.mxu0 0.0
    %1338 = vmatpush1.msra.mxu0 0.0
    %1339 = vmatprep.subr.mxu0 0.0
    %1340 = vmatpush1.msra.mxu0 0.0
    %1341 = vmatprep.subr.mxu0 0.0
    %1342 = vmatpush1.msra.mxu0 0.0
    %1343 = vmatprep.subr.mxu0 0.0
    %1344 = vmatpush1.msra.mxu0 0.0
    %1345 = vmatprep.subr.mxu0 0.0
    %1346 = vmatpush1.msra.mxu0 0.0
    %1347 = vmatprep.subr.mxu0 0.0
    %1348 = vmatpush1.msra.mxu0 0.0
    %1349 = vmatprep.subr.mxu0 0.0
    %1350 = vmatpush1.msra.mxu0 0.0
    %1351 = vmatprep.subr.mxu0 0.0
    %1352 = vmatpush1.msra.mxu0 0.0
    %1353 = vmatprep.subr.mxu0 0.0
    %1354 = vmatpush1.msra.mxu0 0.0
    %1355 = vmatprep.subr.mxu0 0.0
    %1356 = vmatpush1.msra.mxu0 0.0
    %1357 = vmatprep.subr.mxu0 0.0
    %1358 = vmatpush1.msra.mxu0 0.0
    %1359 = vmatprep.subr.mxu0 0.0
    %1360 = vmatpush1.msra.mxu0 0.0
    %1361 = vmatprep.subr.mxu0 0.0
    %1362 = vmatpush1.msra.mxu0 0.0
    %1363 = vmatprep.subr.mxu0 0.0
    %1364 = vmatpush1.msra.mxu0 0.0
    %1365 = vmatprep.subr.mxu0 0.0
    %1366 = vmatpush1.msra.mxu0 0.0
    %1367 = vmatprep.subr.mxu0 0.0
    %1368 = vmatpush1.msra.mxu0 0.0
    %1369 = vmatprep.subr.mxu0 0.0
    %1370 = vmatpush1.msra.mxu0 0.0
    %1371 = vmatprep.subr.mxu0 0.0
    %1372 = vmatpush1.msra.mxu0 0.0
    %1373 = vmatprep.subr.mxu0 0.0
    %1374 = vmatpush1.msra.mxu0 0.0
    %1375 = vmatprep.subr.mxu0 0.0
    %1376 = vmatpush1.msra.mxu0 0.0
    %1377 = vmatprep.subr.mxu0 0.0
    %1378 = vmatpush1.msra.mxu0 0.0
    %1379 = vmatprep.subr.mxu0 0.0
    %1380 = vmatpush1.msra.mxu0 0.0
    %1381 = vmatprep.subr.mxu0 0.0
    %1382 = vmatpush1.msra.mxu0 0.0
    %1383 = vmatprep.subr.mxu0 0.0
    %1384 = vmatpush1.msra.mxu0 0.0
    %1385 = vmatprep.subr.mxu0 0.0
    %1386 = vmatpush1.msra.mxu0 0.0
    %1387 = vmatprep.subr.mxu0 0.0
    %1388 = vmatpush1.msra.mxu0 0.0
    %1389 = vmatprep.subr.mxu0 0.0
    %1390 = vmatpush1.msra.mxu0 0.0
    %1391 = vmatprep.mubr.f32.mxu0 0.0
    %1392 = vmatmul.mubr.f32.gmra.mrb[0].mxu0 %v1322
    %v1393 = vpop.f32.mrb[0].mxu0
    %v1394 = vadd.f32 %v1308, %v1393
    %v1395 = vpop.f32.mrb[0].mxu0
    %1396 = vmatprep.mubr.f32.mxu0 0.0
    %1397 = vmatmul.mubr.f32.gmra.mrb[0].mxu0 %v1325
    %v1398 = vpop.f32.mrb[0].mxu0
    %v1399 = vadd.f32 %v1308, %v1398
    %v1400 = vpop.f32.mrb[0].mxu0
    %1401 = vdwg.mxu0
    %1402 = vst.msk [vmem:[#allocation8] sm:$0xff] %vm81, %v1394
    %1403 = vst.msk [vmem:[#allocation8 + $0x8] sm:$0xff] %vm81, %v1399
    // Predicated region
    $region26: #{tpu_custom_call.1} parent=1 // pred_check
      _
    $region27: #{tpu_custom_call.1} parent=1 // pred_check_branch
      %1405 = sbr.rel (0) target = $region29
    $region28: #{tpu_custom_call.1} parent=1 // pred_region
      %s1407 = ssub.s32 256, 256
      %1408 = vsyncadd [#allocation4], %s1407
      %s1409 = sshll.u32 [#allocation8], 4
      %s1410 = int_to_ptr.vmem [resolvable:$true] %s1409
      %1415 = dma.vmem_to_hbm [thread:$0]  %s1410, 256, %s3, [#allocation4], 128, 128, 8
    $region29: #{tpu_custom_call.1} parent=1 // pred_fallthru
      _
    // Predicated region
    $region30: #{tpu_custom_call.1} parent=1 // pred_check
      _
    $region31: #{tpu_custom_call.1} parent=1 // pred_check_branch
      %1417 = sbr.rel (0) target = $region33
    $region32: #{tpu_custom_call.1} parent=1 // pred_region
      %1418 = dma.done [#allocation4], 256
    $region33: #{tpu_custom_call.1} parent=1 // pred_fallthru
      _
    %1419 = vsyncpa [#allocation3], 1
    %1420 = vsyncpa [#allocation6], 1
    %1421 = vsyncpa [#allocation4], 1

</llo_original>
